<compile_context>
chip_gen: v6e
topology: v6e:2x2x1
jax: 0.10.0
libtpu: 0.0.40
codegen_flags: <defaults>
</compile_context>

<pallas_src>
import jax
import jax.numpy as jnp
from jax.experimental import pallas as pl
from jax.experimental.pallas import tpu as pltpu


# ---- model hyperparameters (match the module) --------------------------------
HIDDEN = 32
LAYERS = 2           # number of hidden->hidden layers
INPUTS = 16
OUTPUTS = 4

LANE = 128           # TPU lane width: pad every fan-out dim to this
TILE_B = 512         # batch rows per grid step (big tile -> amortize ~0.35us/step)
BATCH = 1024         # demo batch; gives grid=(2,) so v7x megacore uses both TCs


def nnnet_kernel(x_ref, w_in_ref, b_in_ref, w_hid_ref, b_hid_ref,
                 w_out_ref, b_out_ref, o_ref):
    """Whole MLP forward for one batch tile, fused with sigmoid(5*z).

    Weights are bf16, lane-padded to 128 on the fan-out axis (padding is zero so
    it never affects the real lanes).  Accumulation + elementwise math is f32.
    """
    x = x_ref[...]                                                   # (TILE_B, INPUTS) bf16

    # input layer: Linear + ReLU -> (TILE_B, LANE), lanes >= HIDDEN are exactly 0
    h = jnp.dot(x, w_in_ref[...], preferred_element_type=jnp.float32)
    h = jnp.maximum(h + b_in_ref[...], 0.0)

    # hidden layers: Linear + ReLU (static unroll over stacked, padded weights)
    for l in range(LAYERS):
        h = jnp.dot(h.astype(jnp.bfloat16), w_hid_ref[l],
                    preferred_element_type=jnp.float32)
        h = jnp.maximum(h + b_hid_ref[l], 0.0)

    # output layer: Linear (no activation); padded lanes carry z = 0
    z = jnp.dot(h.astype(jnp.bfloat16), w_out_ref[...],
                preferred_element_type=jnp.float32)
    z = z + b_out_ref[...]                                           # (TILE_B, LANE)

    # NNNet head: sigmoid(z * 5)   (padded lanes become 0.5; sliced off in wrapper)
    o_ref[...] = jax.nn.sigmoid(z * 5.0)


def nnnet_forward(x, packed_params):
    """x: (batch, INPUTS) f32. Returns (batch, OUTPUTS) f32."""
    (w_in, b_in, w_hid, b_hid, w_out, b_out) = packed_params

    batch = x.shape[0]
    pad_b = (-batch) % TILE_B
    if pad_b:
        x = jnp.pad(x, ((0, pad_b), (0, 0)))
    padded_batch = x.shape[0]
    grid = (padded_batch // TILE_B,)

    x_bf16 = x.astype(jnp.bfloat16)

    # Weight / bias blocks: full arrays with constant block index -> VMEM-resident.
    full2 = lambda a: pl.BlockSpec(a.shape, lambda i: (0, 0))
    full3 = lambda a: pl.BlockSpec(a.shape, lambda i: (0, 0, 0))

    out_padded = pl.pallas_call(
        nnnet_kernel,
        out_shape=jax.ShapeDtypeStruct((padded_batch, LANE), jnp.float32),
        grid=grid,
        in_specs=[
            pl.BlockSpec((TILE_B, INPUTS), lambda i: (i, 0)),   # x: tiled over batch
            full2(w_in),
            full2(b_in),
            full3(w_hid),
            full3(b_hid),
            full2(w_out),
            full2(b_out),
        ],
        out_specs=pl.BlockSpec((TILE_B, LANE), lambda i: (i, 0)),   # lane-dense output slab
        compiler_params=pltpu.CompilerParams(
            dimension_semantics=("parallel",)),
    )(x_bf16, w_in, b_in, w_hid, b_hid, w_out, b_out)

    return out_padded[:batch, :OUTPUTS]


# ---- parameter construction ---------------------------------------------------
def init_params(key):
    """Deterministic init mimicking nn.Linear default (U(-1/sqrt(fan_in), +)). Unpadded f32."""
    ks = jax.random.split(key, 3)

    def linear(k, fan_in, fan_out):
        kw, kb = jax.random.split(k)
        bound = 1.0 / jnp.sqrt(jnp.float32(fan_in))
        w = jax.random.uniform(kw, (fan_in, fan_out), jnp.float32, -bound, bound)
        b = jax.random.uniform(kb, (1, fan_out), jnp.float32, -bound, bound)
        return w, b

    w_in, b_in = linear(ks[0], INPUTS, HIDDEN)

    hk = jax.random.split(ks[1], LAYERS)
    w_hid, b_hid = [], []
    for l in range(LAYERS):
        w, b = linear(hk[l], HIDDEN, HIDDEN)
        w_hid.append(w)
        b_hid.append(b)
    w_hid = jnp.stack(w_hid, axis=0)        # (LAYERS, HIDDEN, HIDDEN)
    b_hid = jnp.stack(b_hid, axis=0)        # (LAYERS, 1, HIDDEN)

    w_out, b_out = linear(ks[2], HIDDEN, OUTPUTS)
    return (w_in, b_in, w_hid, b_hid, w_out, b_out)


def pack_params(params):
    """Zero-pad fan-out (and hidden fan-in) dims to 128 lanes; weights -> bf16, biases stay f32."""
    (w_in, b_in, w_hid, b_hid, w_out, b_out) = params

    def pad_last(a, to):
        return jnp.pad(a, [(0, 0)] * (a.ndim - 1) + [(0, to - a.shape[-1])])

    def pad_last2(a, to_r, to_c):
        return jnp.pad(a, [(0, 0)] * (a.ndim - 2)
                          + [(0, to_r - a.shape[-2]), (0, to_c - a.shape[-1])])

    w_in_p  = pad_last(w_in, LANE).astype(jnp.bfloat16)            # (INPUTS, 128)
    b_in_p  = pad_last(b_in, LANE)                                  # (1, 128) f32
    w_hid_p = pad_last2(w_hid, LANE, LANE).astype(jnp.bfloat16)     # (LAYERS, 128, 128)
    b_hid_p = pad_last(b_hid, LANE)                                 # (LAYERS, 1, 128) f32
    w_out_p = pad_last2(w_out, LANE, LANE).astype(jnp.bfloat16)     # (128, 128)
    b_out_p = pad_last(b_out, LANE)                                 # (1, 128) f32
    return (w_in_p, b_in_p, w_hid_p, b_hid_p, w_out_p, b_out_p)


# ---- references ----------------------------------------------------------------
def reference_forward_bf16(x, params):
    """Same math as the kernel (bf16 matmul operands, f32 accumulate/elementwise)."""
    (w_in, b_in, w_hid, b_hid, w_out, b_out) = params
    h = jnp.dot(x.astype(jnp.bfloat16), w_in.astype(jnp.bfloat16),
                preferred_element_type=jnp.float32)
    h = jnp.maximum(h + b_in, 0.0)
    for l in range(LAYERS):
        h = jnp.dot(h.astype(jnp.bfloat16), w_hid[l].astype(jnp.bfloat16),
                    preferred_element_type=jnp.float32)
        h = jnp.maximum(h + b_hid[l], 0.0)
    z = jnp.dot(h.astype(jnp.bfloat16), w_out.astype(jnp.bfloat16),
                preferred_element_type=jnp.float32) + b_out
    return jax.nn.sigmoid(z * 5.0)


def reference_forward_f32(x, params):
    (w_in, b_in, w_hid, b_hid, w_out, b_out) = params
    h = jnp.maximum(x @ w_in + b_in, 0.0)
    for l in range(LAYERS):
        h = jnp.maximum(h @ w_hid[l] + b_hid[l], 0.0)
    return jax.nn.sigmoid((h @ w_out + b_out) * 5.0)


if __name__ == "__main__":
    key = jax.random.PRNGKey(0)
    kx, kp = jax.random.split(key)

    x = jax.random.normal(kx, (BATCH, INPUTS), jnp.float32)
    params = init_params(kp)
    packed = pack_params(params)

    out = nnnet_forward(x, packed)
    out = jax.block_until_ready(out)
    assert out.shape == (BATCH, OUTPUTS)

    ref_bf16 = reference_forward_bf16(x, params)   # same precision recipe as the kernel
    ref_f32 = reference_forward_f32(x, params)     # full-f32 sanity check

    assert jnp.allclose(out, ref_bf16, atol=2e-3, rtol=2e-3), "mismatch vs bf16 reference"
    assert jnp.allclose(out, ref_f32, atol=5e-2, rtol=5e-2), "mismatch vs f32 reference"

    print("KERNEL_OK")
</pallas_src>

<mosaic_0001>
module attributes {stable_mosaic.version = 11 : i64} {
  func.func @nnnet_kernel(%arg0: i32, %arg1: memref<512x16xbf16, #tpu.memory_space<vmem>>, %arg2: memref<16x128xbf16, #tpu.memory_space<vmem>>, %arg3: memref<1x128xf32, #tpu.memory_space<vmem>>, %arg4: memref<2x128x128xbf16, #tpu.memory_space<vmem>>, %arg5: memref<2x1x128xf32, #tpu.memory_space<vmem>>, %arg6: memref<128x128xbf16, #tpu.memory_space<vmem>>, %arg7: memref<1x128xf32, #tpu.memory_space<vmem>>, %arg8: memref<512x128xf32, #tpu.memory_space<vmem>>) attributes {dimension_semantics = [#tpu.dimension_semantics<parallel>], iteration_bounds = array<i64: 2>, scalar_prefetch = 0 : i64, scratch_operands = 0 : i64, tpu.core_type = #tpu.core_type<tc>, window_params = [{transform_indices = @transform_0, window_bounds = array<i64: 512, 16>}, {pipeline_mode = #tpu.pipeline_mode<synchronous>, transform_indices = @transform_1, window_bounds = array<i64: 16, 128>}, {pipeline_mode = #tpu.pipeline_mode<synchronous>, transform_indices = @transform_2, window_bounds = array<i64: 1, 128>}, {pipeline_mode = #tpu.pipeline_mode<synchronous>, transform_indices = @transform_3, window_bounds = array<i64: 2, 128, 128>}, {pipeline_mode = #tpu.pipeline_mode<synchronous>, transform_indices = @transform_4, window_bounds = array<i64: 2, 1, 128>}, {pipeline_mode = #tpu.pipeline_mode<synchronous>, transform_indices = @transform_5, window_bounds = array<i64: 128, 128>}, {pipeline_mode = #tpu.pipeline_mode<synchronous>, transform_indices = @transform_6, window_bounds = array<i64: 1, 128>}, {transform_indices = @transform_7, window_bounds = array<i64: 512, 128>}]} {
    %c0 = arith.constant 0 : index
    %c0_0 = arith.constant 0 : index
    %0 = vector.load %arg1[%c0, %c0_0] : memref<512x16xbf16, #tpu.memory_space<vmem>>, vector<512x16xbf16>
    %c0_1 = arith.constant 0 : index
    %c0_2 = arith.constant 0 : index
    %1 = vector.load %arg2[%c0_1, %c0_2] : memref<16x128xbf16, #tpu.memory_space<vmem>>, vector<16x128xbf16>
    %cst = arith.constant dense<0.000000e+00> : vector<512x128xf32>
    %2 = tpu.matmul %0, %1, %cst {dimension_numbers = #tpu.dot_dimension_numbers<[1], [0], [0], [1], [0, 0, 1, 1], [], []>} : vector<512x16xbf16>, vector<16x128xbf16>, vector<512x128xf32> -> vector<512x128xf32>
    %c0_3 = arith.constant 0 : index
    %c0_4 = arith.constant 0 : index
    %3 = vector.load %arg3[%c0_3, %c0_4] : memref<1x128xf32, #tpu.memory_space<vmem>>, vector<1x128xf32>
    %4 = vector.broadcast %3 : vector<1x128xf32> to vector<512x128xf32>
    %5 = arith.addf %2, %4 : vector<512x128xf32>
    %cst_5 = arith.constant 0.000000e+00 : f32
    %6 = vector.broadcast %cst_5 : f32 to vector<512x128xf32>
    %7 = arith.maximumf %5, %6 : vector<512x128xf32>
    %8 = arith.truncf %7 : vector<512x128xf32> to vector<512x128xbf16>
    %c0_6 = arith.constant 0 : index
    %c0_7 = arith.constant 0 : index
    %c0_8 = arith.constant 0 : index
    %9 = vector.load %arg4[%c0_6, %c0_7, %c0_8] : memref<2x128x128xbf16, #tpu.memory_space<vmem>>, vector<1x128x128xbf16>
    %10 = vector.shape_cast %9 : vector<1x128x128xbf16> to vector<128x128xbf16>
    %cst_9 = arith.constant dense<0.000000e+00> : vector<512x128xf32>
    %11 = tpu.matmul %8, %10, %cst_9 {dimension_numbers = #tpu.dot_dimension_numbers<[1], [0], [0], [1], [0, 0, 1, 1], [], []>} : vector<512x128xbf16>, vector<128x128xbf16>, vector<512x128xf32> -> vector<512x128xf32>
    %c0_10 = arith.constant 0 : index
    %c0_11 = arith.constant 0 : index
    %c0_12 = arith.constant 0 : index
    %12 = vector.load %arg5[%c0_10, %c0_11, %c0_12] : memref<2x1x128xf32, #tpu.memory_space<vmem>>, vector<1x1x128xf32>
    %13 = vector.shape_cast %12 : vector<1x1x128xf32> to vector<1x128xf32>
    %14 = vector.broadcast %13 : vector<1x128xf32> to vector<512x128xf32>
    %15 = arith.addf %11, %14 : vector<512x128xf32>
    %cst_13 = arith.constant 0.000000e+00 : f32
    %16 = vector.broadcast %cst_13 : f32 to vector<512x128xf32>
    %17 = arith.maximumf %15, %16 : vector<512x128xf32>
    %18 = arith.truncf %17 : vector<512x128xf32> to vector<512x128xbf16>
    %c1 = arith.constant 1 : index
    %c0_14 = arith.constant 0 : index
    %c0_15 = arith.constant 0 : index
    %19 = vector.load %arg4[%c1, %c0_14, %c0_15] : memref<2x128x128xbf16, #tpu.memory_space<vmem>>, vector<1x128x128xbf16>
    %20 = vector.shape_cast %19 : vector<1x128x128xbf16> to vector<128x128xbf16>
    %cst_16 = arith.constant dense<0.000000e+00> : vector<512x128xf32>
    %21 = tpu.matmul %18, %20, %cst_16 {dimension_numbers = #tpu.dot_dimension_numbers<[1], [0], [0], [1], [0, 0, 1, 1], [], []>} : vector<512x128xbf16>, vector<128x128xbf16>, vector<512x128xf32> -> vector<512x128xf32>
    %c1_17 = arith.constant 1 : index
    %c0_18 = arith.constant 0 : index
    %c0_19 = arith.constant 0 : index
    %22 = vector.load %arg5[%c1_17, %c0_18, %c0_19] : memref<2x1x128xf32, #tpu.memory_space<vmem>>, vector<1x1x128xf32>
    %23 = vector.shape_cast %22 : vector<1x1x128xf32> to vector<1x128xf32>
    %24 = vector.broadcast %23 : vector<1x128xf32> to vector<512x128xf32>
    %25 = arith.addf %21, %24 : vector<512x128xf32>
    %cst_20 = arith.constant 0.000000e+00 : f32
    %26 = vector.broadcast %cst_20 : f32 to vector<512x128xf32>
    %27 = arith.maximumf %25, %26 : vector<512x128xf32>
    %28 = arith.truncf %27 : vector<512x128xf32> to vector<512x128xbf16>
    %c0_21 = arith.constant 0 : index
    %c0_22 = arith.constant 0 : index
    %29 = vector.load %arg6[%c0_21, %c0_22] : memref<128x128xbf16, #tpu.memory_space<vmem>>, vector<128x128xbf16>
    %cst_23 = arith.constant dense<0.000000e+00> : vector<512x128xf32>
    %30 = tpu.matmul %28, %29, %cst_23 {dimension_numbers = #tpu.dot_dimension_numbers<[1], [0], [0], [1], [0, 0, 1, 1], [], []>} : vector<512x128xbf16>, vector<128x128xbf16>, vector<512x128xf32> -> vector<512x128xf32>
    %c0_24 = arith.constant 0 : index
    %c0_25 = arith.constant 0 : index
    %31 = vector.load %arg7[%c0_24, %c0_25] : memref<1x128xf32, #tpu.memory_space<vmem>>, vector<1x128xf32>
    %32 = vector.broadcast %31 : vector<1x128xf32> to vector<512x128xf32>
    %33 = arith.addf %30, %32 : vector<512x128xf32>
    %cst_26 = arith.constant 5.000000e+00 : f32
    %34 = vector.broadcast %cst_26 : f32 to vector<512x128xf32>
    %35 = arith.mulf %33, %34 : vector<512x128xf32>
    %36 = arith.negf %35 : vector<512x128xf32>
    %37 = math.exp %36 : vector<512x128xf32>
    %cst_27 = arith.constant 1.000000e+00 : f32
    %38 = vector.broadcast %cst_27 : f32 to vector<512x128xf32>
    %39 = arith.addf %38, %37 : vector<512x128xf32>
    %40 = arith.divf %38, %39 : vector<512x128xf32>
    %c0_28 = arith.constant 0 : index
    %c0_29 = arith.constant 0 : index
    %41 = vector.load %arg8[%c0_28, %c0_29] : memref<512x128xf32, #tpu.memory_space<vmem>>, vector<512x128xf32>
    tpu.vector_store %arg8[%c0_28, %c0_29], %40 {strides = array<i32>} : memref<512x128xf32, #tpu.memory_space<vmem>>, vector<512x128xf32>,
    return
  }
  func.func @transform_0(%arg0: i32) -> (i32, i32) {
    %c0_i32 = arith.constant 0 : i32
    %c0_i32_0 = arith.constant 0 : i32
    return %arg0, %c0_i32 : i32, i32
  }
  func.func @transform_1(%arg0: i32) -> (i32, i32) {
    %c0_i32 = arith.constant 0 : i32
    %c0_i32_0 = arith.constant 0 : i32
    %c0_i32_1 = arith.constant 0 : i32
    return %c0_i32, %c0_i32_0 : i32, i32
  }
  func.func @transform_2(%arg0: i32) -> (i32, i32) {
    %c0_i32 = arith.constant 0 : i32
    %c0_i32_0 = arith.constant 0 : i32
    %c0_i32_1 = arith.constant 0 : i32
    return %c0_i32, %c0_i32_0 : i32, i32
  }
  func.func @transform_3(%arg0: i32) -> (i32, i32, i32) {
    %c0_i32 = arith.constant 0 : i32
    %c0_i32_0 = arith.constant 0 : i32
    %c0_i32_1 = arith.constant 0 : i32
    %c0_i32_2 = arith.constant 0 : i32
    return %c0_i32, %c0_i32_0, %c0_i32_1 : i32, i32, i32
  }
  func.func @transform_4(%arg0: i32) -> (i32, i32, i32) {
    %c0_i32 = arith.constant 0 : i32
    %c0_i32_0 = arith.constant 0 : i32
    %c0_i32_1 = arith.constant 0 : i32
    %c0_i32_2 = arith.constant 0 : i32
    return %c0_i32, %c0_i32_0, %c0_i32_1 : i32, i32, i32
  }
  func.func @transform_5(%arg0: i32) -> (i32, i32) {
    %c0_i32 = arith.constant 0 : i32
    %c0_i32_0 = arith.constant 0 : i32
    %c0_i32_1 = arith.constant 0 : i32
    return %c0_i32, %c0_i32_0 : i32, i32
  }
  func.func @transform_6(%arg0: i32) -> (i32, i32) {
    %c0_i32 = arith.constant 0 : i32
    %c0_i32_0 = arith.constant 0 : i32
    %c0_i32_1 = arith.constant 0 : i32
    return %c0_i32, %c0_i32_0 : i32, i32
  }
  func.func @transform_7(%arg0: i32) -> (i32, i32) {
    %c0_i32 = arith.constant 0 : i32
    %c0_i32_0 = arith.constant 0 : i32
    return %arg0, %c0_i32 : i32, i32
  }
}

</mosaic_0001>

<llo_original>
// kernel: tpu_custom_call.1
$region0: #{tpu_custom_call.1}
  #allocation0 [shape = 'u32[]', space=smem, size = 0x4, offset = 0x4, fixed_abs, tag = 'smem constant byte address 0x4 - core index']
  #allocation1 [shape = 'u32[144,128]{1,0:T(1,128)}', space=vmem, size = 0x12000, scoped, tag = 'internal scratch']
  %s0 = inlined_call_operand.vmem [shape: bf16[1024,16], index: 0, kind: input, shape index: {}]
  %s1 = inlined_call_operand.vmem [shape: bf16[16,128], index: 1, kind: input, shape index: {}]
  %s2 = inlined_call_operand.vmem [shape: f32[1,128], index: 2, kind: input, shape index: {}]
  %s3 = inlined_call_operand.vmem [shape: bf16[2,128,128], index: 3, kind: input, shape index: {}]
  %s4 = inlined_call_operand.vmem [shape: f32[2,1,128], index: 4, kind: input, shape index: {}]
  %s5 = inlined_call_operand.vmem [shape: bf16[128,128], index: 5, kind: input, shape index: {}]
  %s6 = inlined_call_operand.vmem [shape: f32[1,128], index: 6, kind: input, shape index: {}]
  %s7 = inlined_call_operand.hbm [shape: f32[1024,128], index: 7, kind: output, shape index: {}]
  %s8 = sld [smem:[#allocation0]]
  $region61: #{tpu_custom_call.1} parent=0
    _
  %s10 = ssub.s32 1, %s8
  %s11 = scalar_select 0, %s10, %s8
  $region1: #{tpu_custom_call.1} parent=0
    #allocation2 [shape = 'u8[524288]{0}', space=vmem, size = 0x80000, scoped, tag = 'output window, operand 0']
    #allocation3 [shape = 's32[2]{0}', space=sflag, size = 0x8, scoped, tag = 'scoped memory for tpu_custom_call.1']
    %12 = vsyncpa [#allocation3], 0
    %s13 = scalar_lea.sflag [#allocation3], 1
    %14 = vsyncpa %s13, 0
    loop: start=0, step=1, limit=4
    $region2: #{tpu_custom_call.1} parent=1 // loop_pre_header
      _
    $region3: #{tpu_custom_call.1} parent=1 // loop_header
      %s16 = sphi 0, %s20
      %p17 = scmp.ge.s32.totalorder %s16, 4
      %s26 = sphi 0, %s28
      %s29 = sphi 0, %s26
      %s30 = sphi 0, %s29
      %s46 = sphi 0, %s30
      %s50 = sphi 0, %s50
      %s52 = sphi 0, %s50
      %s53 = sphi 0, %s52
      %s67 = sphi 0, %s53
      %s71 = sphi 0, %s71
      %s73 = sphi 0, %s71
      %s74 = sphi 0, %s73
      %s88 = sphi 0, %s74
      %s92 = sphi 0, %s92
      %s94 = sphi 0, %s92
      %s95 = sphi 0, %s94
      %s109 = sphi 0, %s95
      %s113 = sphi 0, %s113
      %s115 = sphi 0, %s113
      %s116 = sphi 0, %s115
      %s130 = sphi 0, %s116
      %s134 = sphi 0, %s134
      %s136 = sphi 0, %s134
      %s137 = sphi 0, %s136
      %s151 = sphi 0, %s137
      %s155 = sphi 0, %s155
      %s157 = sphi 0, %s155
      %s158 = sphi 0, %s157
      %s172 = sphi 0, %s158
      %s178 = sphi 0, %s180
      %s181 = sphi 0, %s178
      %s182 = sphi 0, %s181
      %s198 = sphi 0, %s182
    $region4: #{tpu_custom_call.1} parent=1 // loop_header_branch
      %19 = sbr.rel (%p17) target = $region8
    $region5: #{tpu_custom_call.1} parent=1 // loop_body
      %s21 = ssub.s32 %s16, 1
      %s22 = ssub.s32 %s16, 2
      %s23 = sadd.s32 %s16, 1
      %s24 = ssub.s32 %s16, %s23
      %p25 = scmp.eq.s32.totalorder %s24, 0
      %s27 = sadd.s32 %s26, 1
      %s28 = scalar_select %p25, %s26, %s27
      %p31 = pneg %p25
      %p32 = scmp.eq.s32.totalorder %s16, 1
      %p33 = por %p31, %p32
      %p34 = scmp.ne.s32.totalorder %s26, %s29
      %p35 = scmp.eq.s32.totalorder %s16, 0
      %p36 = por %p34, %p35
      %p37 = scmp.ne.s32.totalorder %s26, %s29
      %p38 = scmp.eq.s32.totalorder %s21, 1
      %p39 = por %p37, %p38
      %p40 = scmp.ne.s32.totalorder %s29, %s30
      %p41 = scmp.eq.s32.totalorder %s21, 0
      %p42 = por %p40, %p41
      %p43 = scmp.ne.s32.totalorder %s29, %s30
      %p44 = scmp.eq.s32.totalorder %s22, 1
      %p45 = por %p43, %p44
      %p47 = scmp.ne.s32.totalorder %s30, %s46
      %p48 = scmp.eq.s32.totalorder %s22, 0
      %p49 = por %p47, %p48
      %s51 = sadd.s32 %s50, 1
      %p54 = scmp.eq.s32.totalorder %s16, 1
      %p55 = scmp.ne.s32.totalorder %s50, %s52
      %p56 = scmp.eq.s32.totalorder %s16, 0
      %p57 = por %p55, %p56
      %p58 = scmp.ne.s32.totalorder %s50, %s52
      %p59 = scmp.eq.s32.totalorder %s21, 1
      %p60 = por %p58, %p59
      %p61 = scmp.ne.s32.totalorder %s52, %s53
      %p62 = scmp.eq.s32.totalorder %s21, 0
      %p63 = por %p61, %p62
      %p64 = scmp.ne.s32.totalorder %s52, %s53
      %p65 = scmp.eq.s32.totalorder %s22, 1
      %p66 = por %p64, %p65
      %p68 = scmp.ne.s32.totalorder %s53, %s67
      %p69 = scmp.eq.s32.totalorder %s22, 0
      %p70 = por %p68, %p69
      %s72 = sadd.s32 %s71, 1
      %p75 = scmp.eq.s32.totalorder %s16, 1
      %p76 = scmp.ne.s32.totalorder %s71, %s73
      %p77 = scmp.eq.s32.totalorder %s16, 0
      %p78 = por %p76, %p77
      %p79 = scmp.ne.s32.totalorder %s71, %s73
      %p80 = scmp.eq.s32.totalorder %s21, 1
      %p81 = por %p79, %p80
      %p82 = scmp.ne.s32.totalorder %s73, %s74
      %p83 = scmp.eq.s32.totalorder %s21, 0
      %p84 = por %p82, %p83
      %p85 = scmp.ne.s32.totalorder %s73, %s74
      %p86 = scmp.eq.s32.totalorder %s22, 1
      %p87 = por %p85, %p86
      %p89 = scmp.ne.s32.totalorder %s74, %s88
      %p90 = scmp.eq.s32.totalorder %s22, 0
      %p91 = por %p89, %p90
      %s93 = sadd.s32 %s92, 1
      %p96 = scmp.eq.s32.totalorder %s16, 1
      %p97 = scmp.ne.s32.totalorder %s92, %s94
      %p98 = scmp.eq.s32.totalorder %s16, 0
      %p99 = por %p97, %p98
      %p100 = scmp.ne.s32.totalorder %s92, %s94
      %p101 = scmp.eq.s32.totalorder %s21, 1
      %p102 = por %p100, %p101
      %p103 = scmp.ne.s32.totalorder %s94, %s95
      %p104 = scmp.eq.s32.totalorder %s21, 0
      %p105 = por %p103, %p104
      %p106 = scmp.ne.s32.totalorder %s94, %s95
      %p107 = scmp.eq.s32.totalorder %s22, 1
      %p108 = por %p106, %p107
      %p110 = scmp.ne.s32.totalorder %s95, %s109
      %p111 = scmp.eq.s32.totalorder %s22, 0
      %p112 = por %p110, %p111
      %s114 = sadd.s32 %s113, 1
      %p117 = scmp.eq.s32.totalorder %s16, 1
      %p118 = scmp.ne.s32.totalorder %s113, %s115
      %p119 = scmp.eq.s32.totalorder %s16, 0
      %p120 = por %p118, %p119
      %p121 = scmp.ne.s32.totalorder %s113, %s115
      %p122 = scmp.eq.s32.totalorder %s21, 1
      %p123 = por %p121, %p122
      %p124 = scmp.ne.s32.totalorder %s115, %s116
      %p125 = scmp.eq.s32.totalorder %s21, 0
      %p126 = por %p124, %p125
      %p127 = scmp.ne.s32.totalorder %s115, %s116
      %p128 = scmp.eq.s32.totalorder %s22, 1
      %p129 = por %p127, %p128
      %p131 = scmp.ne.s32.totalorder %s116, %s130
      %p132 = scmp.eq.s32.totalorder %s22, 0
      %p133 = por %p131, %p132
      %s135 = sadd.s32 %s134, 1
      %p138 = scmp.eq.s32.totalorder %s16, 1
      %p139 = scmp.ne.s32.totalorder %s134, %s136
      %p140 = scmp.eq.s32.totalorder %s16, 0
      %p141 = por %p139, %p140
      %p142 = scmp.ne.s32.totalorder %s134, %s136
      %p143 = scmp.eq.s32.totalorder %s21, 1
      %p144 = por %p142, %p143
      %p145 = scmp.ne.s32.totalorder %s136, %s137
      %p146 = scmp.eq.s32.totalorder %s21, 0
      %p147 = por %p145, %p146
      %p148 = scmp.ne.s32.totalorder %s136, %s137
      %p149 = scmp.eq.s32.totalorder %s22, 1
      %p150 = por %p148, %p149
      %p152 = scmp.ne.s32.totalorder %s137, %s151
      %p153 = scmp.eq.s32.totalorder %s22, 0
      %p154 = por %p152, %p153
      %s156 = sadd.s32 %s155, 1
      %p159 = scmp.eq.s32.totalorder %s16, 1
      %p160 = scmp.ne.s32.totalorder %s155, %s157
      %p161 = scmp.eq.s32.totalorder %s16, 0
      %p162 = por %p160, %p161
      %p163 = scmp.ne.s32.totalorder %s155, %s157
      %p164 = scmp.eq.s32.totalorder %s21, 1
      %p165 = por %p163, %p164
      %p166 = scmp.ne.s32.totalorder %s157, %s158
      %p167 = scmp.eq.s32.totalorder %s21, 0
      %p168 = por %p166, %p167
      %p169 = scmp.ne.s32.totalorder %s157, %s158
      %p170 = scmp.eq.s32.totalorder %s22, 1
      %p171 = por %p169, %p170
      %p173 = scmp.ne.s32.totalorder %s158, %s172
      %p174 = scmp.eq.s32.totalorder %s22, 0
      %p175 = por %p173, %p174
      %s176 = ssub.s32 %s16, %s23
      %p177 = scmp.eq.s32.totalorder %s176, 0
      %s179 = sadd.s32 %s178, 1
      %s180 = scalar_select %p177, %s178, %s179
      %p183 = pneg %p177
      %p184 = scmp.eq.s32.totalorder %s16, 1
      %p185 = por %p183, %p184
      %p186 = scmp.ne.s32.totalorder %s178, %s181
      %p187 = scmp.eq.s32.totalorder %s16, 0
      %p188 = por %p186, %p187
      %p189 = scmp.ne.s32.totalorder %s178, %s181
      %p190 = scmp.eq.s32.totalorder %s21, 1
      %p191 = por %p189, %p190
      %p192 = scmp.ne.s32.totalorder %s181, %s182
      %p193 = scmp.eq.s32.totalorder %s21, 0
      %p194 = por %p192, %p193
      %p195 = scmp.ne.s32.totalorder %s181, %s182
      %p196 = scmp.eq.s32.totalorder %s22, 1
      %p197 = por %p195, %p196
      %p199 = scmp.ne.s32.totalorder %s182, %s198
      %p200 = scmp.eq.s32.totalorder %s22, 0
      %p201 = por %p199, %p200
      %p202 = scmp.le.s32.totalorder 1, %s16
      %p203 = scmp.lt.s32.totalorder %s16, 3
      %p204 = pnand %p202, %p203
      %p205 = pneg %p204
      // Predicated region
      $region9: #{tpu_custom_call.1} parent=5 // pred_check
        _
      $region10: #{tpu_custom_call.1} parent=5 // pred_check_branch
        %207 = sbr.rel (%p204) target = $region12
      $region11: #{tpu_custom_call.1} parent=5 // pred_region
        %s208 = ssub.s32 %s16, 1
        // Predicated region
        $region13: #{tpu_custom_call.1} parent=11 // pred_check
          %p209 = pneg %p63
        $region14: #{tpu_custom_call.1} parent=11 // pred_check_branch
          %211 = sbr.rel (%p209) target = $region16
        $region15: #{tpu_custom_call.1} parent=11 // pred_region
          _
        $region16: #{tpu_custom_call.1} parent=11 // pred_fallthru
          _
        // Predicated region
        $region17: #{tpu_custom_call.1} parent=11 // pred_check
          %p212 = pneg %p84
        $region18: #{tpu_custom_call.1} parent=11 // pred_check_branch
          %214 = sbr.rel (%p212) target = $region20
        $region19: #{tpu_custom_call.1} parent=11 // pred_region
          _
        $region20: #{tpu_custom_call.1} parent=11 // pred_fallthru
          _
        // Predicated region
        $region21: #{tpu_custom_call.1} parent=11 // pred_check
          %p215 = pneg %p105
        $region22: #{tpu_custom_call.1} parent=11 // pred_check_branch
          %217 = sbr.rel (%p215) target = $region24
        $region23: #{tpu_custom_call.1} parent=11 // pred_region
          _
        $region24: #{tpu_custom_call.1} parent=11 // pred_fallthru
          _
        // Predicated region
        $region25: #{tpu_custom_call.1} parent=11 // pred_check
          %p218 = pneg %p126
        $region26: #{tpu_custom_call.1} parent=11 // pred_check_branch
          %220 = sbr.rel (%p218) target = $region28
        $region27: #{tpu_custom_call.1} parent=11 // pred_region
          _
        $region28: #{tpu_custom_call.1} parent=11 // pred_fallthru
          _
        // Predicated region
        $region29: #{tpu_custom_call.1} parent=11 // pred_check
          %p221 = pneg %p147
        $region30: #{tpu_custom_call.1} parent=11 // pred_check_branch
          %223 = sbr.rel (%p221) target = $region32
        $region31: #{tpu_custom_call.1} parent=11 // pred_region
          _
        $region32: #{tpu_custom_call.1} parent=11 // pred_fallthru
          _
        // Predicated region
        $region33: #{tpu_custom_call.1} parent=11 // pred_check
          %p224 = pneg %p168
        $region34: #{tpu_custom_call.1} parent=11 // pred_check_branch
          %226 = sbr.rel (%p224) target = $region36
        $region35: #{tpu_custom_call.1} parent=11 // pred_region
          _
        $region36: #{tpu_custom_call.1} parent=11 // pred_fallthru
          _
      $region12: #{tpu_custom_call.1} parent=5 // pred_fallthru
        _
      %p227 = scmp.lt.s32.totalorder %s16, 2
      // Predicated region
      $region37: #{tpu_custom_call.1} parent=5 // pred_check
        %p228 = pneg %p227
      $region38: #{tpu_custom_call.1} parent=5 // pred_check_branch
        %230 = sbr.rel (%p228) target = $region40
      $region39: #{tpu_custom_call.1} parent=5 // pred_region
        // Predicated region
        $region41: #{tpu_custom_call.1} parent=39 // pred_check
          %p231 = pneg %p36
        $region42: #{tpu_custom_call.1} parent=39 // pred_check_branch
          %233 = sbr.rel (%p231) target = $region44
        $region43: #{tpu_custom_call.1} parent=39 // pred_region
          %s234 = smul.u32 64, %s16
          %p235 = scmp.lt.s32.totalorder %s234, 127
          %s236 = scalar_select %p235, %s234, 127
          %s237 = smul.addr %s236, 4
          %s238 = scalar_lea.vmem %s0, %s237
          %s239 = smul.u32 64, %s16
        $region44: #{tpu_custom_call.1} parent=39 // pred_fallthru
          _
      $region40: #{tpu_custom_call.1} parent=5 // pred_fallthru
        _
      %p240 = scmp.le.s32.totalorder 1, %s16
      %p241 = scmp.lt.s32.totalorder %s16, 3
      %p242 = pnand %p240, %p241
      %p243 = pneg %p242
      // Predicated region
      $region45: #{tpu_custom_call.1} parent=5 // pred_check
        _
      $region46: #{tpu_custom_call.1} parent=5 // pred_check_branch
        %245 = sbr.rel (%p242) target = $region48
      $region47: #{tpu_custom_call.1} parent=5 // pred_region
        %s246 = ssub.s32 %s16, 1
        %s247 = smul.u32 64, %s21
        %p248 = scmp.lt.s32.totalorder %s247, 127
        %s249 = scalar_select %p248, %s247, 127
        %s250 = smul.addr %s249, 4
        %s251 = scalar_lea.vmem %s0, %s250
        %p252 = pneg %p42
        %p253 = pneg %p39
        %p254 = pneg %p63
        %p255 = pneg %p60
        %p256 = pneg %p84
        %p257 = pneg %p81
        %p258 = pneg %p105
        %p259 = pneg %p102
        %p260 = pneg %p126
        %p261 = pneg %p123
        %p262 = pneg %p147
        %p263 = pneg %p144
        %p264 = pneg %p168
        %p265 = pneg %p165
        %p266 = pneg %p194
        %p267 = pneg %p191
        %s268 = sand.u32 %s181, 1
        %s269 = scalar_lea.sflag [#allocation3], %s268
        %s270 = sand.u32 %s181, 1
        %s271 = smul.addr %s270, 512
        %s272 = scalar_lea.vmem [#allocation2], %s271
        %s273 = smul.u32 64, %s21
        %p274 = scmp.lt.s32.totalorder %s273, 127
        %s275 = scalar_select %p274, %s273, 127
        %s276 = smul.addr %s275, 4
        %s277 = scalar_lea.vmem %s0, %s276
        %s278 = smul.u32 64, %s21
        %s279 = smul.u32 64, %s21
        %v281 = vld [vmem:[%s277] sm:$0xf]
        %v282 = vld [vmem:[%s277 + $0x4] sm:$0xf]
        %v283 = vld [vmem:[%s277 + $0x8] sm:$0xf]
        %v284 = vld [vmem:[%s277 + $0xc] sm:$0xf]
        %v285 = vld [vmem:[%s277 + $0x10] sm:$0xf]
        %v286 = vld [vmem:[%s277 + $0x14] sm:$0xf]
        %v287 = vld [vmem:[%s277 + $0x18] sm:$0xf]
        %v288 = vld [vmem:[%s277 + $0x1c] sm:$0xf]
        %v289 = vld [vmem:[%s277 + $0x20] sm:$0xf]
        %v290 = vld [vmem:[%s277 + $0x24] sm:$0xf]
        %v291 = vld [vmem:[%s277 + $0x28] sm:$0xf]
        %v292 = vld [vmem:[%s277 + $0x2c] sm:$0xf]
        %v293 = vld [vmem:[%s277 + $0x30] sm:$0xf]
        %v294 = vld [vmem:[%s277 + $0x34] sm:$0xf]
        %v295 = vld [vmem:[%s277 + $0x38] sm:$0xf]
        %v296 = vld [vmem:[%s277 + $0x3c] sm:$0xf]
        %v297 = vld [vmem:[%s277 + $0x40] sm:$0xf]
        %v298 = vld [vmem:[%s277 + $0x44] sm:$0xf]
        %v299 = vld [vmem:[%s277 + $0x48] sm:$0xf]
        %v300 = vld [vmem:[%s277 + $0x4c] sm:$0xf]
        %v301 = vld [vmem:[%s277 + $0x50] sm:$0xf]
        %v302 = vld [vmem:[%s277 + $0x54] sm:$0xf]
        %v303 = vld [vmem:[%s277 + $0x58] sm:$0xf]
        %v304 = vld [vmem:[%s277 + $0x5c] sm:$0xf]
        %v305 = vld [vmem:[%s277 + $0x60] sm:$0xf]
        %v306 = vld [vmem:[%s277 + $0x64] sm:$0xf]
        %v307 = vld [vmem:[%s277 + $0x68] sm:$0xf]
        %v308 = vld [vmem:[%s277 + $0x6c] sm:$0xf]
        %v309 = vld [vmem:[%s277 + $0x70] sm:$0xf]
        %v310 = vld [vmem:[%s277 + $0x74] sm:$0xf]
        %v311 = vld [vmem:[%s277 + $0x78] sm:$0xf]
        %v312 = vld [vmem:[%s277 + $0x7c] sm:$0xf]
        %v313 = vld [vmem:[%s277 + $0x80] sm:$0xf]
        %v314 = vld [vmem:[%s277 + $0x84] sm:$0xf]
        %v315 = vld [vmem:[%s277 + $0x88] sm:$0xf]
        %v316 = vld [vmem:[%s277 + $0x8c] sm:$0xf]
        %v317 = vld [vmem:[%s277 + $0x90] sm:$0xf]
        %v318 = vld [vmem:[%s277 + $0x94] sm:$0xf]
        %v319 = vld [vmem:[%s277 + $0x98] sm:$0xf]
        %v320 = vld [vmem:[%s277 + $0x9c] sm:$0xf]
        %v321 = vld [vmem:[%s277 + $0xa0] sm:$0xf]
        %v322 = vld [vmem:[%s277 + $0xa4] sm:$0xf]
        %v323 = vld [vmem:[%s277 + $0xa8] sm:$0xf]
        %v324 = vld [vmem:[%s277 + $0xac] sm:$0xf]
        %v325 = vld [vmem:[%s277 + $0xb0] sm:$0xf]
        %v326 = vld [vmem:[%s277 + $0xb4] sm:$0xf]
        %v327 = vld [vmem:[%s277 + $0xb8] sm:$0xf]
        %v328 = vld [vmem:[%s277 + $0xbc] sm:$0xf]
        %v329 = vld [vmem:[%s277 + $0xc0] sm:$0xf]
        %v330 = vld [vmem:[%s277 + $0xc4] sm:$0xf]
        %v331 = vld [vmem:[%s277 + $0xc8] sm:$0xf]
        %v332 = vld [vmem:[%s277 + $0xcc] sm:$0xf]
        %v333 = vld [vmem:[%s277 + $0xd0] sm:$0xf]
        %v334 = vld [vmem:[%s277 + $0xd4] sm:$0xf]
        %v335 = vld [vmem:[%s277 + $0xd8] sm:$0xf]
        %v336 = vld [vmem:[%s277 + $0xdc] sm:$0xf]
        %v337 = vld [vmem:[%s277 + $0xe0] sm:$0xf]
        %v338 = vld [vmem:[%s277 + $0xe4] sm:$0xf]
        %v339 = vld [vmem:[%s277 + $0xe8] sm:$0xf]
        %v340 = vld [vmem:[%s277 + $0xec] sm:$0xf]
        %v341 = vld [vmem:[%s277 + $0xf0] sm:$0xf]
        %v342 = vld [vmem:[%s277 + $0xf4] sm:$0xf]
        %v343 = vld [vmem:[%s277 + $0xf8] sm:$0xf]
        %v344 = vld [vmem:[%s277 + $0xfc] sm:$0xf]
        %v345 = vld [vmem:[%s1] sm:$0xf]
        %v346 = vld [vmem:[%s1 + $0x4] sm:$0xf]
        %v347 = vld [vmem:[%s2] sm:$0x1]
        %v349 = vlaneseq
        %v350 = vshrl.u32 %v349, 7
        %v351 = vsub.s32 0, %v350
        %v352 = vrot.slane %v347, %v351
        %v418 = vunpack.c.l.b16 %v281
        %v419 = vunpack.c.l.b16 %v282
        %v420 = vunpack.c.l.b16 %v283
        %v421 = vunpack.c.l.b16 %v284
        %v422 = vunpack.c.l.b16 %v285
        %v423 = vunpack.c.l.b16 %v286
        %v424 = vunpack.c.l.b16 %v287
        %v425 = vunpack.c.l.b16 %v288
        %v426 = vunpack.c.l.b16 %v289
        %v427 = vunpack.c.l.b16 %v290
        %v428 = vunpack.c.l.b16 %v291
        %v429 = vunpack.c.l.b16 %v292
        %v430 = vunpack.c.l.b16 %v293
        %v431 = vunpack.c.l.b16 %v294
        %v432 = vunpack.c.l.b16 %v295
        %v433 = vunpack.c.l.b16 %v296
        %v434 = vunpack.c.l.b16 %v297
        %v435 = vunpack.c.l.b16 %v298
        %v436 = vunpack.c.l.b16 %v299
        %v437 = vunpack.c.l.b16 %v300
        %v438 = vunpack.c.l.b16 %v301
        %v439 = vunpack.c.l.b16 %v302
        %v440 = vunpack.c.l.b16 %v303
        %v441 = vunpack.c.l.b16 %v304
        %v442 = vunpack.c.l.b16 %v305
        %v443 = vunpack.c.l.b16 %v306
        %v444 = vunpack.c.l.b16 %v307
        %v445 = vunpack.c.l.b16 %v308
        %v446 = vunpack.c.l.b16 %v309
        %v447 = vunpack.c.l.b16 %v310
        %v448 = vunpack.c.l.b16 %v311
        %v449 = vunpack.c.l.b16 %v312
        %v450 = vunpack.c.l.b16 %v313
        %v451 = vunpack.c.l.b16 %v314
        %v452 = vunpack.c.l.b16 %v315
        %v453 = vunpack.c.l.b16 %v316
        %v454 = vunpack.c.l.b16 %v317
        %v455 = vunpack.c.l.b16 %v318
        %v456 = vunpack.c.l.b16 %v319
        %v457 = vunpack.c.l.b16 %v320
        %v458 = vunpack.c.l.b16 %v321
        %v459 = vunpack.c.l.b16 %v322
        %v460 = vunpack.c.l.b16 %v323
        %v461 = vunpack.c.l.b16 %v324
        %v462 = vunpack.c.l.b16 %v325
        %v463 = vunpack.c.l.b16 %v326
        %v464 = vunpack.c.l.b16 %v327
        %v465 = vunpack.c.l.b16 %v328
        %v466 = vunpack.c.l.b16 %v329
        %v467 = vunpack.c.l.b16 %v330
        %v468 = vunpack.c.l.b16 %v331
        %v469 = vunpack.c.l.b16 %v332
        %v470 = vunpack.c.l.b16 %v333
        %v471 = vunpack.c.l.b16 %v334
        %v472 = vunpack.c.l.b16 %v335
        %v473 = vunpack.c.l.b16 %v336
        %v474 = vunpack.c.l.b16 %v337
        %v475 = vunpack.c.l.b16 %v338
        %v476 = vunpack.c.l.b16 %v339
        %v477 = vunpack.c.l.b16 %v340
        %v478 = vunpack.c.l.b16 %v341
        %v479 = vunpack.c.l.b16 %v342
        %v480 = vunpack.c.l.b16 %v343
        %v481 = vunpack.c.l.b16 %v344
        %v482 = vpack.c.b16 %v419, %v418
        %v483 = vpack.c.b16 %v421, %v420
        %v484 = vpack.c.b16 %v423, %v422
        %v485 = vpack.c.b16 %v425, %v424
        %v486 = vpack.c.b16 %v427, %v426
        %v487 = vpack.c.b16 %v429, %v428
        %v488 = vpack.c.b16 %v431, %v430
        %v489 = vpack.c.b16 %v433, %v432
        %v490 = vpack.c.b16 %v435, %v434
        %v491 = vpack.c.b16 %v437, %v436
        %v492 = vpack.c.b16 %v439, %v438
        %v493 = vpack.c.b16 %v441, %v440
        %v494 = vpack.c.b16 %v443, %v442
        %v495 = vpack.c.b16 %v445, %v444
        %v496 = vpack.c.b16 %v447, %v446
        %v497 = vpack.c.b16 %v449, %v448
        %v498 = vpack.c.b16 %v451, %v450
        %v499 = vpack.c.b16 %v453, %v452
        %v500 = vpack.c.b16 %v455, %v454
        %v501 = vpack.c.b16 %v457, %v456
        %v502 = vpack.c.b16 %v459, %v458
        %v503 = vpack.c.b16 %v461, %v460
        %v504 = vpack.c.b16 %v463, %v462
        %v505 = vpack.c.b16 %v465, %v464
        %v506 = vpack.c.b16 %v467, %v466
        %v507 = vpack.c.b16 %v469, %v468
        %v508 = vpack.c.b16 %v471, %v470
        %v509 = vpack.c.b16 %v473, %v472
        %v510 = vpack.c.b16 %v475, %v474
        %v511 = vpack.c.b16 %v477, %v476
        %v512 = vpack.c.b16 %v479, %v478
        %v513 = vpack.c.b16 %v481, %v480
        %v516 = vunpack.c.l.b16 %v345
        %v517 = vunpack.c.l.b16 %v346
        %v518 = vpack.c.b16 %v517, %v516
        %vm520 = vcmask 130048
        %v522 = vsel %vm520, %v482, 0
        %v525 = vsel %vm520, %v483, 0
        %v528 = vsel %vm520, %v484, 0
        %v531 = vsel %vm520, %v485, 0
        %v534 = vsel %vm520, %v486, 0
        %v537 = vsel %vm520, %v487, 0
        %v540 = vsel %vm520, %v488, 0
        %v543 = vsel %vm520, %v489, 0
        %v546 = vsel %vm520, %v490, 0
        %v549 = vsel %vm520, %v491, 0
        %v552 = vsel %vm520, %v492, 0
        %v555 = vsel %vm520, %v493, 0
        %v558 = vsel %vm520, %v494, 0
        %v561 = vsel %vm520, %v495, 0
        %v564 = vsel %vm520, %v496, 0
        %v567 = vsel %vm520, %v497, 0
        %v570 = vsel %vm520, %v498, 0
        %v573 = vsel %vm520, %v499, 0
        %v576 = vsel %vm520, %v500, 0
        %v579 = vsel %vm520, %v501, 0
        %v582 = vsel %vm520, %v502, 0
        %v585 = vsel %vm520, %v503, 0
        %v588 = vsel %vm520, %v504, 0
        %v591 = vsel %vm520, %v505, 0
        %v594 = vsel %vm520, %v506, 0
        %v597 = vsel %vm520, %v507, 0
        %v600 = vsel %vm520, %v508, 0
        %v603 = vsel %vm520, %v509, 0
        %v606 = vsel %vm520, %v510, 0
        %v609 = vsel %vm520, %v511, 0
        %v612 = vsel %vm520, %v512, 0
        %v615 = vsel %vm520, %v513, 0
        %617 = vmatprep.subr.bf16.mxu0 0
        %618 = vmatpush1.bf16.msra.mxu0 0
        %619 = vmatprep.subr.bf16.mxu0 0
        %620 = vmatpush1.bf16.msra.mxu0 0
        %621 = vmatprep.subr.bf16.mxu0 0
        %622 = vmatpush1.bf16.msra.mxu0 0
        %623 = vmatprep.subr.bf16.mxu0 0
        %624 = vmatpush1.bf16.msra.mxu0 0
        %625 = vmatprep.subr.bf16.mxu0 0
        %626 = vmatpush1.bf16.msra.mxu0 0
        %627 = vmatprep.subr.bf16.mxu0 0
        %628 = vmatpush1.bf16.msra.mxu0 0
        %629 = vmatprep.subr.bf16.mxu0 0
        %630 = vmatpush1.bf16.msra.mxu0 0
        %631 = vmatprep.subr.bf16.mxu0 0
        %632 = vmatpush1.bf16.msra.mxu0 %v518
        %633 = vmatprep.subr.bf16.mxu0 0
        %634 = vmatpush2.bf16.msra.mxu0 0
        %635 = vmatprep.subr.bf16.mxu0 0
        %636 = vmatpush2.bf16.msra.mxu0 0
        %637 = vmatprep.subr.bf16.mxu0 0
        %638 = vmatpush2.bf16.msra.mxu0 0
        %639 = vmatprep.subr.bf16.mxu0 0
        %640 = vmatpush2.bf16.msra.mxu0 0
        %641 = vmatprep.subr.bf16.mxu0 0
        %642 = vmatpush2.bf16.msra.mxu0 0
        %643 = vmatprep.subr.bf16.mxu0 0
        %644 = vmatpush2.bf16.msra.mxu0 0
        %645 = vmatprep.subr.bf16.mxu0 0
        %646 = vmatpush2.bf16.msra.mxu0 0
        %647 = vmatprep.subr.bf16.mxu0 0
        %648 = vmatpush2.bf16.msra.mxu0 0
        %649 = vmatprep.mubr.bf16.mxu0 0
        %650 = vmatmul.mubr.bf16.gmra.mxu0 %v522
        %v651 = vpop.f32.mrf.mxu0
        %v652 = vadd.f32 %v352, %v651
        %v653 = vpop.f32.mrf.mxu0
        %v654 = vpop.f32.mrf.mxu0
        %v655 = vadd.f32 %v352, %v654
        %v656 = vpop.f32.mrf.mxu0
        %657 = vmatprep.mubr.bf16.mxu0 0
        %658 = vmatmul.mubr.bf16.gmra.mxu0 %v525
        %v659 = vpop.f32.mrf.mxu0
        %v660 = vadd.f32 %v352, %v659
        %v661 = vpop.f32.mrf.mxu0
        %v662 = vpop.f32.mrf.mxu0
        %v663 = vadd.f32 %v352, %v662
        %v664 = vpop.f32.mrf.mxu0
        %665 = vmatprep.mubr.bf16.mxu0 0
        %666 = vmatmul.mubr.bf16.gmra.mxu0 %v528
        %v667 = vpop.f32.mrf.mxu0
        %v668 = vadd.f32 %v352, %v667
        %v669 = vpop.f32.mrf.mxu0
        %v670 = vpop.f32.mrf.mxu0
        %v671 = vadd.f32 %v352, %v670
        %v672 = vpop.f32.mrf.mxu0
        %673 = vmatprep.mubr.bf16.mxu0 0
        %674 = vmatmul.mubr.bf16.gmra.mxu0 %v531
        %v675 = vpop.f32.mrf.mxu0
        %v676 = vadd.f32 %v352, %v675
        %v677 = vpop.f32.mrf.mxu0
        %v678 = vpop.f32.mrf.mxu0
        %v679 = vadd.f32 %v352, %v678
        %v680 = vpop.f32.mrf.mxu0
        %681 = vmatprep.mubr.bf16.mxu0 0
        %682 = vmatmul.mubr.bf16.gmra.mxu0 %v534
        %v683 = vpop.f32.mrf.mxu0
        %v684 = vadd.f32 %v352, %v683
        %v685 = vpop.f32.mrf.mxu0
        %v686 = vpop.f32.mrf.mxu0
        %v687 = vadd.f32 %v352, %v686
        %v688 = vpop.f32.mrf.mxu0
        %689 = vmatprep.mubr.bf16.mxu0 0
        %690 = vmatmul.mubr.bf16.gmra.mxu0 %v537
        %v691 = vpop.f32.mrf.mxu0
        %v692 = vadd.f32 %v352, %v691
        %v693 = vpop.f32.mrf.mxu0
        %v694 = vpop.f32.mrf.mxu0
        %v695 = vadd.f32 %v352, %v694
        %v696 = vpop.f32.mrf.mxu0
        %697 = vmatprep.mubr.bf16.mxu0 0
        %698 = vmatmul.mubr.bf16.gmra.mxu0 %v540
        %v699 = vpop.f32.mrf.mxu0
        %v700 = vadd.f32 %v352, %v699
        %v701 = vpop.f32.mrf.mxu0
        %v702 = vpop.f32.mrf.mxu0
        %v703 = vadd.f32 %v352, %v702
        %v704 = vpop.f32.mrf.mxu0
        %705 = vmatprep.mubr.bf16.mxu0 0
        %706 = vmatmul.mubr.bf16.gmra.mxu0 %v543
        %v707 = vpop.f32.mrf.mxu0
        %v708 = vadd.f32 %v352, %v707
        %v709 = vpop.f32.mrf.mxu0
        %v710 = vpop.f32.mrf.mxu0
        %v711 = vadd.f32 %v352, %v710
        %v712 = vpop.f32.mrf.mxu0
        %713 = vmatprep.mubr.bf16.mxu0 0
        %714 = vmatmul.mubr.bf16.gmra.mxu0 %v546
        %v715 = vpop.f32.mrf.mxu0
        %v716 = vadd.f32 %v352, %v715
        %v717 = vpop.f32.mrf.mxu0
        %v718 = vpop.f32.mrf.mxu0
        %v719 = vadd.f32 %v352, %v718
        %v720 = vpop.f32.mrf.mxu0
        %721 = vmatprep.mubr.bf16.mxu0 0
        %722 = vmatmul.mubr.bf16.gmra.mxu0 %v549
        %v723 = vpop.f32.mrf.mxu0
        %v724 = vadd.f32 %v352, %v723
        %v725 = vpop.f32.mrf.mxu0
        %v726 = vpop.f32.mrf.mxu0
        %v727 = vadd.f32 %v352, %v726
        %v728 = vpop.f32.mrf.mxu0
        %729 = vmatprep.mubr.bf16.mxu0 0
        %730 = vmatmul.mubr.bf16.gmra.mxu0 %v552
        %v731 = vpop.f32.mrf.mxu0
        %v732 = vadd.f32 %v352, %v731
        %v733 = vpop.f32.mrf.mxu0
        %v734 = vpop.f32.mrf.mxu0
        %v735 = vadd.f32 %v352, %v734
        %v736 = vpop.f32.mrf.mxu0
        %737 = vmatprep.mubr.bf16.mxu0 0
        %738 = vmatmul.mubr.bf16.gmra.mxu0 %v555
        %v739 = vpop.f32.mrf.mxu0
        %v740 = vadd.f32 %v352, %v739
        %v741 = vpop.f32.mrf.mxu0
        %v742 = vpop.f32.mrf.mxu0
        %v743 = vadd.f32 %v352, %v742
        %v744 = vpop.f32.mrf.mxu0
        %745 = vmatprep.mubr.bf16.mxu0 0
        %746 = vmatmul.mubr.bf16.gmra.mxu0 %v558
        %v747 = vpop.f32.mrf.mxu0
        %v748 = vadd.f32 %v352, %v747
        %v749 = vpop.f32.mrf.mxu0
        %v750 = vpop.f32.mrf.mxu0
        %v751 = vadd.f32 %v352, %v750
        %v752 = vpop.f32.mrf.mxu0
        %753 = vmatprep.mubr.bf16.mxu0 0
        %754 = vmatmul.mubr.bf16.gmra.mxu0 %v561
        %v755 = vpop.f32.mrf.mxu0
        %v756 = vadd.f32 %v352, %v755
        %v757 = vpop.f32.mrf.mxu0
        %v758 = vpop.f32.mrf.mxu0
        %v759 = vadd.f32 %v352, %v758
        %v760 = vpop.f32.mrf.mxu0
        %761 = vmatprep.mubr.bf16.mxu0 0
        %762 = vmatmul.mubr.bf16.gmra.mxu0 %v564
        %v763 = vpop.f32.mrf.mxu0
        %v764 = vadd.f32 %v352, %v763
        %v765 = vpop.f32.mrf.mxu0
        %v766 = vpop.f32.mrf.mxu0
        %v767 = vadd.f32 %v352, %v766
        %v768 = vpop.f32.mrf.mxu0
        %769 = vmatprep.mubr.bf16.mxu0 0
        %770 = vmatmul.mubr.bf16.gmra.mxu0 %v567
        %v771 = vpop.f32.mrf.mxu0
        %v772 = vadd.f32 %v352, %v771
        %v773 = vpop.f32.mrf.mxu0
        %v774 = vpop.f32.mrf.mxu0
        %v775 = vadd.f32 %v352, %v774
        %v776 = vpop.f32.mrf.mxu0
        %777 = vmatprep.mubr.bf16.mxu0 0
        %778 = vmatmul.mubr.bf16.gmra.mxu0 %v570
        %v779 = vpop.f32.mrf.mxu0
        %v780 = vadd.f32 %v352, %v779
        %v781 = vpop.f32.mrf.mxu0
        %v782 = vpop.f32.mrf.mxu0
        %v783 = vadd.f32 %v352, %v782
        %v784 = vpop.f32.mrf.mxu0
        %785 = vmatprep.mubr.bf16.mxu0 0
        %786 = vmatmul.mubr.bf16.gmra.mxu0 %v573
        %v787 = vpop.f32.mrf.mxu0
        %v788 = vadd.f32 %v352, %v787
        %v789 = vpop.f32.mrf.mxu0
        %v790 = vpop.f32.mrf.mxu0
        %v791 = vadd.f32 %v352, %v790
        %v792 = vpop.f32.mrf.mxu0
        %793 = vmatprep.mubr.bf16.mxu0 0
        %794 = vmatmul.mubr.bf16.gmra.mxu0 %v576
        %v795 = vpop.f32.mrf.mxu0
        %v796 = vadd.f32 %v352, %v795
        %v797 = vpop.f32.mrf.mxu0
        %v798 = vpop.f32.mrf.mxu0
        %v799 = vadd.f32 %v352, %v798
        %v800 = vpop.f32.mrf.mxu0
        %801 = vmatprep.mubr.bf16.mxu0 0
        %802 = vmatmul.mubr.bf16.gmra.mxu0 %v579
        %v803 = vpop.f32.mrf.mxu0
        %v804 = vadd.f32 %v352, %v803
        %v805 = vpop.f32.mrf.mxu0
        %v806 = vpop.f32.mrf.mxu0
        %v807 = vadd.f32 %v352, %v806
        %v808 = vpop.f32.mrf.mxu0
        %809 = vmatprep.mubr.bf16.mxu0 0
        %810 = vmatmul.mubr.bf16.gmra.mxu0 %v582
        %v811 = vpop.f32.mrf.mxu0
        %v812 = vadd.f32 %v352, %v811
        %v813 = vpop.f32.mrf.mxu0
        %v814 = vpop.f32.mrf.mxu0
        %v815 = vadd.f32 %v352, %v814
        %v816 = vpop.f32.mrf.mxu0
        %817 = vmatprep.mubr.bf16.mxu0 0
        %818 = vmatmul.mubr.bf16.gmra.mxu0 %v585
        %v819 = vpop.f32.mrf.mxu0
        %v820 = vadd.f32 %v352, %v819
        %v821 = vpop.f32.mrf.mxu0
        %v822 = vpop.f32.mrf.mxu0
        %v823 = vadd.f32 %v352, %v822
        %v824 = vpop.f32.mrf.mxu0
        %825 = vmatprep.mubr.bf16.mxu0 0
        %826 = vmatmul.mubr.bf16.gmra.mxu0 %v588
        %v827 = vpop.f32.mrf.mxu0
        %v828 = vadd.f32 %v352, %v827
        %v829 = vpop.f32.mrf.mxu0
        %v830 = vpop.f32.mrf.mxu0
        %v831 = vadd.f32 %v352, %v830
        %v832 = vpop.f32.mrf.mxu0
        %833 = vmatprep.mubr.bf16.mxu0 0
        %834 = vmatmul.mubr.bf16.gmra.mxu0 %v591
        %v835 = vpop.f32.mrf.mxu0
        %v836 = vadd.f32 %v352, %v835
        %v837 = vpop.f32.mrf.mxu0
        %v838 = vpop.f32.mrf.mxu0
        %v839 = vadd.f32 %v352, %v838
        %v840 = vpop.f32.mrf.mxu0
        %841 = vmatprep.mubr.bf16.mxu0 0
        %842 = vmatmul.mubr.bf16.gmra.mxu0 %v594
        %v843 = vpop.f32.mrf.mxu0
        %v844 = vadd.f32 %v352, %v843
        %v845 = vpop.f32.mrf.mxu0
        %v846 = vpop.f32.mrf.mxu0
        %v847 = vadd.f32 %v352, %v846
        %v848 = vpop.f32.mrf.mxu0
        %849 = vmatprep.mubr.bf16.mxu0 0
        %850 = vmatmul.mubr.bf16.gmra.mxu0 %v597
        %v851 = vpop.f32.mrf.mxu0
        %v852 = vadd.f32 %v352, %v851
        %v853 = vpop.f32.mrf.mxu0
        %v854 = vpop.f32.mrf.mxu0
        %v855 = vadd.f32 %v352, %v854
        %v856 = vpop.f32.mrf.mxu0
        %857 = vmatprep.mubr.bf16.mxu0 0
        %858 = vmatmul.mubr.bf16.gmra.mxu0 %v600
        %v859 = vpop.f32.mrf.mxu0
        %v860 = vadd.f32 %v352, %v859
        %v861 = vpop.f32.mrf.mxu0
        %v862 = vpop.f32.mrf.mxu0
        %v863 = vadd.f32 %v352, %v862
        %v864 = vpop.f32.mrf.mxu0
        %865 = vmatprep.mubr.bf16.mxu0 0
        %866 = vmatmul.mubr.bf16.gmra.mxu0 %v603
        %v867 = vpop.f32.mrf.mxu0
        %v868 = vadd.f32 %v352, %v867
        %v869 = vpop.f32.mrf.mxu0
        %v870 = vpop.f32.mrf.mxu0
        %v871 = vadd.f32 %v352, %v870
        %v872 = vpop.f32.mrf.mxu0
        %873 = vmatprep.mubr.bf16.mxu0 0
        %874 = vmatmul.mubr.bf16.gmra.mxu0 %v606
        %v875 = vpop.f32.mrf.mxu0
        %v876 = vadd.f32 %v352, %v875
        %v877 = vpop.f32.mrf.mxu0
        %v878 = vpop.f32.mrf.mxu0
        %v879 = vadd.f32 %v352, %v878
        %v880 = vpop.f32.mrf.mxu0
        %881 = vmatprep.mubr.bf16.mxu0 0
        %882 = vmatmul.mubr.bf16.gmra.mxu0 %v609
        %v883 = vpop.f32.mrf.mxu0
        %v884 = vadd.f32 %v352, %v883
        %v885 = vpop.f32.mrf.mxu0
        %v886 = vpop.f32.mrf.mxu0
        %v887 = vadd.f32 %v352, %v886
        %v888 = vpop.f32.mrf.mxu0
        %889 = vmatprep.mubr.bf16.mxu0 0
        %890 = vmatmul.mubr.bf16.gmra.mxu0 %v612
        %v891 = vpop.f32.mrf.mxu0
        %v892 = vadd.f32 %v352, %v891
        %v893 = vpop.f32.mrf.mxu0
        %v894 = vpop.f32.mrf.mxu0
        %v895 = vadd.f32 %v352, %v894
        %v896 = vpop.f32.mrf.mxu0
        %897 = vmatprep.mubr.bf16.mxu0 0
        %898 = vmatmul.mubr.bf16.gmra.mxu0 %v615
        %v899 = vpop.f32.mrf.mxu0
        %v900 = vadd.f32 %v352, %v899
        %v901 = vpop.f32.mrf.mxu0
        %v902 = vpop.f32.mrf.mxu0
        %v903 = vadd.f32 %v352, %v902
        %v904 = vpop.f32.mrf.mxu0
        %905 = vdwg.mxu0
        %v906 = vmax.f32 %v652, 0.0
        %v907 = vmax.f32 %v655, 0.0
        %v908 = vmax.f32 %v660, 0.0
        %v909 = vmax.f32 %v663, 0.0
        %v910 = vmax.f32 %v668, 0.0
        %v911 = vmax.f32 %v671, 0.0
        %v912 = vmax.f32 %v676, 0.0
        %v913 = vmax.f32 %v679, 0.0
        %v914 = vmax.f32 %v684, 0.0
        %v915 = vmax.f32 %v687, 0.0
        %v916 = vmax.f32 %v692, 0.0
        %v917 = vmax.f32 %v695, 0.0
        %v918 = vmax.f32 %v700, 0.0
        %v919 = vmax.f32 %v703, 0.0
        %v920 = vmax.f32 %v708, 0.0
        %v921 = vmax.f32 %v711, 0.0
        %v922 = vmax.f32 %v716, 0.0
        %v923 = vmax.f32 %v719, 0.0
        %v924 = vmax.f32 %v724, 0.0
        %v925 = vmax.f32 %v727, 0.0
        %v926 = vmax.f32 %v732, 0.0
        %v927 = vmax.f32 %v735, 0.0
        %v928 = vmax.f32 %v740, 0.0
        %v929 = vmax.f32 %v743, 0.0
        %v930 = vmax.f32 %v748, 0.0
        %v931 = vmax.f32 %v751, 0.0
        %v932 = vmax.f32 %v756, 0.0
        %v933 = vmax.f32 %v759, 0.0
        %v934 = vmax.f32 %v764, 0.0
        %v935 = vmax.f32 %v767, 0.0
        %v936 = vmax.f32 %v772, 0.0
        %v937 = vmax.f32 %v775, 0.0
        %v938 = vmax.f32 %v780, 0.0
        %v939 = vmax.f32 %v783, 0.0
        %v940 = vmax.f32 %v788, 0.0
        %v941 = vmax.f32 %v791, 0.0
        %v942 = vmax.f32 %v796, 0.0
        %v943 = vmax.f32 %v799, 0.0
        %v944 = vmax.f32 %v804, 0.0
        %v945 = vmax.f32 %v807, 0.0
        %v946 = vmax.f32 %v812, 0.0
        %v947 = vmax.f32 %v815, 0.0
        %v948 = vmax.f32 %v820, 0.0
        %v949 = vmax.f32 %v823, 0.0
        %v950 = vmax.f32 %v828, 0.0
        %v951 = vmax.f32 %v831, 0.0
        %v952 = vmax.f32 %v836, 0.0
        %v953 = vmax.f32 %v839, 0.0
        %v954 = vmax.f32 %v844, 0.0
        %v955 = vmax.f32 %v847, 0.0
        %v956 = vmax.f32 %v852, 0.0
        %v957 = vmax.f32 %v855, 0.0
        %v958 = vmax.f32 %v860, 0.0
        %v959 = vmax.f32 %v863, 0.0
        %v960 = vmax.f32 %v868, 0.0
        %v961 = vmax.f32 %v871, 0.0
        %v962 = vmax.f32 %v876, 0.0
        %v963 = vmax.f32 %v879, 0.0
        %v964 = vmax.f32 %v884, 0.0
        %v965 = vmax.f32 %v887, 0.0
        %v966 = vmax.f32 %v892, 0.0
        %v967 = vmax.f32 %v895, 0.0
        %v968 = vmax.f32 %v900, 0.0
        %v969 = vmax.f32 %v903, 0.0
        %v970 = vpack.c.bf16 %v907, %v906
        %v971 = vpack.c.bf16 %v909, %v908
        %v972 = vpack.c.bf16 %v911, %v910
        %v973 = vpack.c.bf16 %v913, %v912
        %v974 = vpack.c.bf16 %v915, %v914
        %v975 = vpack.c.bf16 %v917, %v916
        %v976 = vpack.c.bf16 %v919, %v918
        %v977 = vpack.c.bf16 %v921, %v920
        %v978 = vpack.c.bf16 %v923, %v922
        %v979 = vpack.c.bf16 %v925, %v924
        %v980 = vpack.c.bf16 %v927, %v926
        %v981 = vpack.c.bf16 %v929, %v928
        %v982 = vpack.c.bf16 %v931, %v930
        %v983 = vpack.c.bf16 %v933, %v932
        %v984 = vpack.c.bf16 %v935, %v934
        %v985 = vpack.c.bf16 %v937, %v936
        %v986 = vpack.c.bf16 %v939, %v938
        %v987 = vpack.c.bf16 %v941, %v940
        %v988 = vpack.c.bf16 %v943, %v942
        %v989 = vpack.c.bf16 %v945, %v944
        %v990 = vpack.c.bf16 %v947, %v946
        %v991 = vpack.c.bf16 %v949, %v948
        %v992 = vpack.c.bf16 %v951, %v950
        %v993 = vpack.c.bf16 %v953, %v952
        %v994 = vpack.c.bf16 %v955, %v954
        %v995 = vpack.c.bf16 %v957, %v956
        %v996 = vpack.c.bf16 %v959, %v958
        %v997 = vpack.c.bf16 %v961, %v960
        %v998 = vpack.c.bf16 %v963, %v962
        %v999 = vpack.c.bf16 %v965, %v964
        %v1000 = vpack.c.bf16 %v967, %v966
        %v1001 = vpack.c.bf16 %v969, %v968
        %v1002 = vld [vmem:[%s3] sm:$0xf]
        %v1003 = vld [vmem:[%s3 + $0x4] sm:$0xf]
        %v1004 = vld [vmem:[%s3 + $0x8] sm:$0xf]
        %v1005 = vld [vmem:[%s3 + $0xc] sm:$0xf]
        %v1006 = vld [vmem:[%s3 + $0x10] sm:$0xf]
        %v1007 = vld [vmem:[%s3 + $0x14] sm:$0xf]
        %v1008 = vld [vmem:[%s3 + $0x18] sm:$0xf]
        %v1009 = vld [vmem:[%s3 + $0x1c] sm:$0xf]
        %v1010 = vld [vmem:[%s3 + $0x20] sm:$0xf]
        %v1011 = vld [vmem:[%s3 + $0x24] sm:$0xf]
        %v1012 = vld [vmem:[%s3 + $0x28] sm:$0xf]
        %v1013 = vld [vmem:[%s3 + $0x2c] sm:$0xf]
        %v1014 = vld [vmem:[%s3 + $0x30] sm:$0xf]
        %v1015 = vld [vmem:[%s3 + $0x34] sm:$0xf]
        %v1016 = vld [vmem:[%s3 + $0x38] sm:$0xf]
        %v1017 = vld [vmem:[%s3 + $0x3c] sm:$0xf]
        %v1018 = vld [vmem:[%s4] sm:$0x1]
        %v1020 = vlaneseq
        %v1021 = vshrl.u32 %v1020, 7
        %v1022 = vsub.s32 0, %v1021
        %v1023 = vrot.slane %v1018, %v1022
        %v1041 = vunpack.c.l.b16 %v1002
        %v1042 = vunpack.c.l.b16 %v1003
        %v1043 = vunpack.c.l.b16 %v1004
        %v1044 = vunpack.c.l.b16 %v1005
        %v1045 = vunpack.c.l.b16 %v1006
        %v1046 = vunpack.c.l.b16 %v1007
        %v1047 = vunpack.c.l.b16 %v1008
        %v1048 = vunpack.c.l.b16 %v1009
        %v1049 = vunpack.c.l.b16 %v1010
        %v1050 = vunpack.c.l.b16 %v1011
        %v1051 = vunpack.c.l.b16 %v1012
        %v1052 = vunpack.c.l.b16 %v1013
        %v1053 = vunpack.c.l.b16 %v1014
        %v1054 = vunpack.c.l.b16 %v1015
        %v1055 = vunpack.c.l.b16 %v1016
        %v1056 = vunpack.c.l.b16 %v1017
        %v1057 = vpack.c.b16 %v1042, %v1041
        %v1058 = vpack.c.b16 %v1044, %v1043
        %v1059 = vpack.c.b16 %v1046, %v1045
        %v1060 = vpack.c.b16 %v1048, %v1047
        %v1061 = vpack.c.b16 %v1050, %v1049
        %v1062 = vpack.c.b16 %v1052, %v1051
        %v1063 = vpack.c.b16 %v1054, %v1053
        %v1064 = vpack.c.b16 %v1056, %v1055
        %1073 = vmatprep.subr.bf16.mxu0 0
        %1074 = vmatpush1.bf16.msra.mxu0 %v1064
        %1075 = vmatprep.subr.bf16.mxu0 0
        %1076 = vmatpush1.bf16.msra.mxu0 %v1063
        %1077 = vmatprep.subr.bf16.mxu0 0
        %1078 = vmatpush1.bf16.msra.mxu0 %v1062
        %1079 = vmatprep.subr.bf16.mxu0 0
        %1080 = vmatpush1.bf16.msra.mxu0 %v1061
        %1081 = vmatprep.subr.bf16.mxu0 0
        %1082 = vmatpush1.bf16.msra.mxu0 %v1060
        %1083 = vmatprep.subr.bf16.mxu0 0
        %1084 = vmatpush1.bf16.msra.mxu0 %v1059
        %1085 = vmatprep.subr.bf16.mxu0 0
        %1086 = vmatpush1.bf16.msra.mxu0 %v1058
        %1087 = vmatprep.subr.bf16.mxu0 0
        %1088 = vmatpush1.bf16.msra.mxu0 %v1057
        %1089 = vmatprep.subr.bf16.mxu0 0
        %1090 = vmatpush2.bf16.msra.mxu0 0
        %1091 = vmatprep.subr.bf16.mxu0 0
        %1092 = vmatpush2.bf16.msra.mxu0 0
        %1093 = vmatprep.subr.bf16.mxu0 0
        %1094 = vmatpush2.bf16.msra.mxu0 0
        %1095 = vmatprep.subr.bf16.mxu0 0
        %1096 = vmatpush2.bf16.msra.mxu0 0
        %1097 = vmatprep.subr.bf16.mxu0 0
        %1098 = vmatpush2.bf16.msra.mxu0 0
        %1099 = vmatprep.subr.bf16.mxu0 0
        %1100 = vmatpush2.bf16.msra.mxu0 0
        %1101 = vmatprep.subr.bf16.mxu0 0
        %1102 = vmatpush2.bf16.msra.mxu0 0
        %1103 = vmatprep.subr.bf16.mxu0 0
        %1104 = vmatpush2.bf16.msra.mxu0 0
        %1105 = vmatprep.mubr.bf16.mxu0 0
        %1106 = vmatmul.mubr.bf16.gmra.mxu0 %v970
        %v1107 = vpop.f32.mrf.mxu0
        %v1108 = vadd.f32 %v1023, %v1107
        %v1109 = vpop.f32.mrf.mxu0
        %v1110 = vpop.f32.mrf.mxu0
        %v1111 = vadd.f32 %v1023, %v1110
        %v1112 = vpop.f32.mrf.mxu0
        %1113 = vmatprep.mubr.bf16.mxu0 0
        %1114 = vmatmul.mubr.bf16.gmra.mxu0 %v971
        %v1115 = vpop.f32.mrf.mxu0
        %v1116 = vadd.f32 %v1023, %v1115
        %v1117 = vpop.f32.mrf.mxu0
        %v1118 = vpop.f32.mrf.mxu0
        %v1119 = vadd.f32 %v1023, %v1118
        %v1120 = vpop.f32.mrf.mxu0
        %1121 = vmatprep.mubr.bf16.mxu0 0
        %1122 = vmatmul.mubr.bf16.gmra.mxu0 %v972
        %v1123 = vpop.f32.mrf.mxu0
        %v1124 = vadd.f32 %v1023, %v1123
        %v1125 = vpop.f32.mrf.mxu0
        %v1126 = vpop.f32.mrf.mxu0
        %v1127 = vadd.f32 %v1023, %v1126
        %v1128 = vpop.f32.mrf.mxu0
        %1129 = vmatprep.mubr.bf16.mxu0 0
        %1130 = vmatmul.mubr.bf16.gmra.mxu0 %v973
        %v1131 = vpop.f32.mrf.mxu0
        %v1132 = vadd.f32 %v1023, %v1131
        %v1133 = vpop.f32.mrf.mxu0
        %v1134 = vpop.f32.mrf.mxu0
        %v1135 = vadd.f32 %v1023, %v1134
        %v1136 = vpop.f32.mrf.mxu0
        %1137 = vmatprep.mubr.bf16.mxu0 0
        %1138 = vmatmul.mubr.bf16.gmra.mxu0 %v974
        %v1139 = vpop.f32.mrf.mxu0
        %v1140 = vadd.f32 %v1023, %v1139
        %v1141 = vpop.f32.mrf.mxu0
        %v1142 = vpop.f32.mrf.mxu0
        %v1143 = vadd.f32 %v1023, %v1142
        %v1144 = vpop.f32.mrf.mxu0
        %1145 = vmatprep.mubr.bf16.mxu0 0
        %1146 = vmatmul.mubr.bf16.gmra.mxu0 %v975
        %v1147 = vpop.f32.mrf.mxu0
        %v1148 = vadd.f32 %v1023, %v1147
        %v1149 = vpop.f32.mrf.mxu0
        %v1150 = vpop.f32.mrf.mxu0
        %v1151 = vadd.f32 %v1023, %v1150
        %v1152 = vpop.f32.mrf.mxu0
        %1153 = vmatprep.mubr.bf16.mxu0 0
        %1154 = vmatmul.mubr.bf16.gmra.mxu0 %v976
        %v1155 = vpop.f32.mrf.mxu0
        %v1156 = vadd.f32 %v1023, %v1155
        %v1157 = vpop.f32.mrf.mxu0
        %v1158 = vpop.f32.mrf.mxu0
        %v1159 = vadd.f32 %v1023, %v1158
        %v1160 = vpop.f32.mrf.mxu0
        %1161 = vmatprep.mubr.bf16.mxu0 0
        %1162 = vmatmul.mubr.bf16.gmra.mxu0 %v977
        %v1163 = vpop.f32.mrf.mxu0
        %v1164 = vadd.f32 %v1023, %v1163
        %v1165 = vpop.f32.mrf.mxu0
        %v1166 = vpop.f32.mrf.mxu0
        %v1167 = vadd.f32 %v1023, %v1166
        %v1168 = vpop.f32.mrf.mxu0
        %1169 = vmatprep.mubr.bf16.mxu0 0
        %1170 = vmatmul.mubr.bf16.gmra.mxu0 %v978
        %v1171 = vpop.f32.mrf.mxu0
        %v1172 = vadd.f32 %v1023, %v1171
        %v1173 = vpop.f32.mrf.mxu0
        %v1174 = vpop.f32.mrf.mxu0
        %v1175 = vadd.f32 %v1023, %v1174
        %v1176 = vpop.f32.mrf.mxu0
        %1177 = vmatprep.mubr.bf16.mxu0 0
        %1178 = vmatmul.mubr.bf16.gmra.mxu0 %v979
        %v1179 = vpop.f32.mrf.mxu0
        %v1180 = vadd.f32 %v1023, %v1179
        %v1181 = vpop.f32.mrf.mxu0
        %v1182 = vpop.f32.mrf.mxu0
        %v1183 = vadd.f32 %v1023, %v1182
        %v1184 = vpop.f32.mrf.mxu0
        %1185 = vmatprep.mubr.bf16.mxu0 0
        %1186 = vmatmul.mubr.bf16.gmra.mxu0 %v980
        %v1187 = vpop.f32.mrf.mxu0
        %v1188 = vadd.f32 %v1023, %v1187
        %v1189 = vpop.f32.mrf.mxu0
        %v1190 = vpop.f32.mrf.mxu0
        %v1191 = vadd.f32 %v1023, %v1190
        %v1192 = vpop.f32.mrf.mxu0
        %1193 = vmatprep.mubr.bf16.mxu0 0
        %1194 = vmatmul.mubr.bf16.gmra.mxu0 %v981
        %v1195 = vpop.f32.mrf.mxu0
        %v1196 = vadd.f32 %v1023, %v1195
        %v1197 = vpop.f32.mrf.mxu0
        %v1198 = vpop.f32.mrf.mxu0
        %v1199 = vadd.f32 %v1023, %v1198
        %v1200 = vpop.f32.mrf.mxu0
        %1201 = vmatprep.mubr.bf16.mxu0 0
        %1202 = vmatmul.mubr.bf16.gmra.mxu0 %v982
        %v1203 = vpop.f32.mrf.mxu0
        %v1204 = vadd.f32 %v1023, %v1203
        %v1205 = vpop.f32.mrf.mxu0
        %v1206 = vpop.f32.mrf.mxu0
        %v1207 = vadd.f32 %v1023, %v1206
        %v1208 = vpop.f32.mrf.mxu0
        %1209 = vmatprep.mubr.bf16.mxu0 0
        %1210 = vmatmul.mubr.bf16.gmra.mxu0 %v983
        %v1211 = vpop.f32.mrf.mxu0
        %v1212 = vadd.f32 %v1023, %v1211
        %v1213 = vpop.f32.mrf.mxu0
        %v1214 = vpop.f32.mrf.mxu0
        %v1215 = vadd.f32 %v1023, %v1214
        %v1216 = vpop.f32.mrf.mxu0
        %1217 = vmatprep.mubr.bf16.mxu0 0
        %1218 = vmatmul.mubr.bf16.gmra.mxu0 %v984
        %v1219 = vpop.f32.mrf.mxu0
        %v1220 = vadd.f32 %v1023, %v1219
        %v1221 = vpop.f32.mrf.mxu0
        %v1222 = vpop.f32.mrf.mxu0
        %v1223 = vadd.f32 %v1023, %v1222
        %v1224 = vpop.f32.mrf.mxu0
        %1225 = vmatprep.mubr.bf16.mxu0 0
        %1226 = vmatmul.mubr.bf16.gmra.mxu0 %v985
        %v1227 = vpop.f32.mrf.mxu0
        %v1228 = vadd.f32 %v1023, %v1227
        %v1229 = vpop.f32.mrf.mxu0
        %v1230 = vpop.f32.mrf.mxu0
        %v1231 = vadd.f32 %v1023, %v1230
        %v1232 = vpop.f32.mrf.mxu0
        %1233 = vmatprep.mubr.bf16.mxu0 0
        %1234 = vmatmul.mubr.bf16.gmra.mxu0 %v986
        %v1235 = vpop.f32.mrf.mxu0
        %v1236 = vadd.f32 %v1023, %v1235
        %v1237 = vpop.f32.mrf.mxu0
        %v1238 = vpop.f32.mrf.mxu0
        %v1239 = vadd.f32 %v1023, %v1238
        %v1240 = vpop.f32.mrf.mxu0
        %1241 = vmatprep.mubr.bf16.mxu0 0
        %1242 = vmatmul.mubr.bf16.gmra.mxu0 %v987
        %v1243 = vpop.f32.mrf.mxu0
        %v1244 = vadd.f32 %v1023, %v1243
        %v1245 = vpop.f32.mrf.mxu0
        %v1246 = vpop.f32.mrf.mxu0
        %v1247 = vadd.f32 %v1023, %v1246
        %v1248 = vpop.f32.mrf.mxu0
        %1249 = vmatprep.mubr.bf16.mxu0 0
        %1250 = vmatmul.mubr.bf16.gmra.mxu0 %v988
        %v1251 = vpop.f32.mrf.mxu0
        %v1252 = vadd.f32 %v1023, %v1251
        %v1253 = vpop.f32.mrf.mxu0
        %v1254 = vpop.f32.mrf.mxu0
        %v1255 = vadd.f32 %v1023, %v1254
        %v1256 = vpop.f32.mrf.mxu0
        %1257 = vmatprep.mubr.bf16.mxu0 0
        %1258 = vmatmul.mubr.bf16.gmra.mxu0 %v989
        %v1259 = vpop.f32.mrf.mxu0
        %v1260 = vadd.f32 %v1023, %v1259
        %v1261 = vpop.f32.mrf.mxu0
        %v1262 = vpop.f32.mrf.mxu0
        %v1263 = vadd.f32 %v1023, %v1262
        %v1264 = vpop.f32.mrf.mxu0
        %1265 = vmatprep.mubr.bf16.mxu0 0
        %1266 = vmatmul.mubr.bf16.gmra.mxu0 %v990
        %v1267 = vpop.f32.mrf.mxu0
        %v1268 = vadd.f32 %v1023, %v1267
        %v1269 = vpop.f32.mrf.mxu0
        %v1270 = vpop.f32.mrf.mxu0
        %v1271 = vadd.f32 %v1023, %v1270
        %v1272 = vpop.f32.mrf.mxu0
        %1273 = vmatprep.mubr.bf16.mxu0 0
        %1274 = vmatmul.mubr.bf16.gmra.mxu0 %v991
        %v1275 = vpop.f32.mrf.mxu0
        %v1276 = vadd.f32 %v1023, %v1275
        %v1277 = vpop.f32.mrf.mxu0
        %v1278 = vpop.f32.mrf.mxu0
        %v1279 = vadd.f32 %v1023, %v1278
        %v1280 = vpop.f32.mrf.mxu0
        %1281 = vmatprep.mubr.bf16.mxu0 0
        %1282 = vmatmul.mubr.bf16.gmra.mxu0 %v992
        %v1283 = vpop.f32.mrf.mxu0
        %v1284 = vadd.f32 %v1023, %v1283
        %v1285 = vpop.f32.mrf.mxu0
        %v1286 = vpop.f32.mrf.mxu0
        %v1287 = vadd.f32 %v1023, %v1286
        %v1288 = vpop.f32.mrf.mxu0
        %1289 = vmatprep.mubr.bf16.mxu0 0
        %1290 = vmatmul.mubr.bf16.gmra.mxu0 %v993
        %v1291 = vpop.f32.mrf.mxu0
        %v1292 = vadd.f32 %v1023, %v1291
        %v1293 = vpop.f32.mrf.mxu0
        %v1294 = vpop.f32.mrf.mxu0
        %v1295 = vadd.f32 %v1023, %v1294
        %v1296 = vpop.f32.mrf.mxu0
        %1297 = vmatprep.mubr.bf16.mxu0 0
        %1298 = vmatmul.mubr.bf16.gmra.mxu0 %v994
        %v1299 = vpop.f32.mrf.mxu0
        %v1300 = vadd.f32 %v1023, %v1299
        %v1301 = vpop.f32.mrf.mxu0
        %v1302 = vpop.f32.mrf.mxu0
        %v1303 = vadd.f32 %v1023, %v1302
        %v1304 = vpop.f32.mrf.mxu0
        %1305 = vmatprep.mubr.bf16.mxu0 0
        %1306 = vmatmul.mubr.bf16.gmra.mxu0 %v995
        %v1307 = vpop.f32.mrf.mxu0
        %v1308 = vadd.f32 %v1023, %v1307
        %v1309 = vpop.f32.mrf.mxu0
        %v1310 = vpop.f32.mrf.mxu0
        %v1311 = vadd.f32 %v1023, %v1310
        %v1312 = vpop.f32.mrf.mxu0
        %1313 = vmatprep.mubr.bf16.mxu0 0
        %1314 = vmatmul.mubr.bf16.gmra.mxu0 %v996
        %v1315 = vpop.f32.mrf.mxu0
        %v1316 = vadd.f32 %v1023, %v1315
        %v1317 = vpop.f32.mrf.mxu0
        %v1318 = vpop.f32.mrf.mxu0
        %v1319 = vadd.f32 %v1023, %v1318
        %v1320 = vpop.f32.mrf.mxu0
        %1321 = vmatprep.mubr.bf16.mxu0 0
        %1322 = vmatmul.mubr.bf16.gmra.mxu0 %v997
        %v1323 = vpop.f32.mrf.mxu0
        %v1324 = vadd.f32 %v1023, %v1323
        %v1325 = vpop.f32.mrf.mxu0
        %v1326 = vpop.f32.mrf.mxu0
        %v1327 = vadd.f32 %v1023, %v1326
        %v1328 = vpop.f32.mrf.mxu0
        %1329 = vmatprep.mubr.bf16.mxu0 0
        %1330 = vmatmul.mubr.bf16.gmra.mxu0 %v998
        %v1331 = vpop.f32.mrf.mxu0
        %v1332 = vadd.f32 %v1023, %v1331
        %v1333 = vpop.f32.mrf.mxu0
        %v1334 = vpop.f32.mrf.mxu0
        %v1335 = vadd.f32 %v1023, %v1334
        %v1336 = vpop.f32.mrf.mxu0
        %1337 = vmatprep.mubr.bf16.mxu0 0
        %1338 = vmatmul.mubr.bf16.gmra.mxu0 %v999
        %v1339 = vpop.f32.mrf.mxu0
        %v1340 = vadd.f32 %v1023, %v1339
        %v1341 = vpop.f32.mrf.mxu0
        %v1342 = vpop.f32.mrf.mxu0
        %v1343 = vadd.f32 %v1023, %v1342
        %v1344 = vpop.f32.mrf.mxu0
        %1345 = vmatprep.mubr.bf16.mxu0 0
        %1346 = vmatmul.mubr.bf16.gmra.mxu0 %v1000
        %v1347 = vpop.f32.mrf.mxu0
        %v1348 = vadd.f32 %v1023, %v1347
        %v1349 = vpop.f32.mrf.mxu0
        %v1350 = vpop.f32.mrf.mxu0
        %v1351 = vadd.f32 %v1023, %v1350
        %v1352 = vpop.f32.mrf.mxu0
        %1353 = vmatprep.mubr.bf16.mxu0 0
        %1354 = vmatmul.mubr.bf16.gmra.mxu0 %v1001
        %v1355 = vpop.f32.mrf.mxu0
        %v1356 = vadd.f32 %v1023, %v1355
        %v1357 = vpop.f32.mrf.mxu0
        %v1358 = vpop.f32.mrf.mxu0
        %v1359 = vadd.f32 %v1023, %v1358
        %v1360 = vpop.f32.mrf.mxu0
        %1361 = vdwg.mxu0
        %v1362 = vmax.f32 %v1108, 0.0
        %v1363 = vmax.f32 %v1111, 0.0
        %v1364 = vmax.f32 %v1116, 0.0
        %v1365 = vmax.f32 %v1119, 0.0
        %v1366 = vmax.f32 %v1124, 0.0
        %v1367 = vmax.f32 %v1127, 0.0
        %v1368 = vmax.f32 %v1132, 0.0
        %v1369 = vmax.f32 %v1135, 0.0
        %v1370 = vmax.f32 %v1140, 0.0
        %v1371 = vmax.f32 %v1143, 0.0
        %v1372 = vmax.f32 %v1148, 0.0
        %v1373 = vmax.f32 %v1151, 0.0
        %v1374 = vmax.f32 %v1156, 0.0
        %v1375 = vmax.f32 %v1159, 0.0
        %v1376 = vmax.f32 %v1164, 0.0
        %v1377 = vmax.f32 %v1167, 0.0
        %v1378 = vmax.f32 %v1172, 0.0
        %v1379 = vmax.f32 %v1175, 0.0
        %v1380 = vmax.f32 %v1180, 0.0
        %v1381 = vmax.f32 %v1183, 0.0
        %v1382 = vmax.f32 %v1188, 0.0
        %v1383 = vmax.f32 %v1191, 0.0
        %v1384 = vmax.f32 %v1196, 0.0
        %v1385 = vmax.f32 %v1199, 0.0
        %v1386 = vmax.f32 %v1204, 0.0
        %v1387 = vmax.f32 %v1207, 0.0
        %v1388 = vmax.f32 %v1212, 0.0
        %v1389 = vmax.f32 %v1215, 0.0
        %v1390 = vmax.f32 %v1220, 0.0
        %v1391 = vmax.f32 %v1223, 0.0
        %v1392 = vmax.f32 %v1228, 0.0
        %v1393 = vmax.f32 %v1231, 0.0
        %v1394 = vmax.f32 %v1236, 0.0
        %v1395 = vmax.f32 %v1239, 0.0
        %v1396 = vmax.f32 %v1244, 0.0
        %v1397 = vmax.f32 %v1247, 0.0
        %v1398 = vmax.f32 %v1252, 0.0
        %v1399 = vmax.f32 %v1255, 0.0
        %v1400 = vmax.f32 %v1260, 0.0
        %v1401 = vmax.f32 %v1263, 0.0
        %v1402 = vmax.f32 %v1268, 0.0
        %v1403 = vmax.f32 %v1271, 0.0
        %v1404 = vmax.f32 %v1276, 0.0
        %v1405 = vmax.f32 %v1279, 0.0
        %v1406 = vmax.f32 %v1284, 0.0
        %v1407 = vmax.f32 %v1287, 0.0
        %v1408 = vmax.f32 %v1292, 0.0
        %v1409 = vmax.f32 %v1295, 0.0
        %v1410 = vmax.f32 %v1300, 0.0
        %v1411 = vmax.f32 %v1303, 0.0
        %v1412 = vmax.f32 %v1308, 0.0
        %v1413 = vmax.f32 %v1311, 0.0
        %v1414 = vmax.f32 %v1316, 0.0
        %v1415 = vmax.f32 %v1319, 0.0
        %v1416 = vmax.f32 %v1324, 0.0
        %v1417 = vmax.f32 %v1327, 0.0
        %v1418 = vmax.f32 %v1332, 0.0
        %v1419 = vmax.f32 %v1335, 0.0
        %v1420 = vmax.f32 %v1340, 0.0
        %v1421 = vmax.f32 %v1343, 0.0
        %v1422 = vmax.f32 %v1348, 0.0
        %v1423 = vmax.f32 %v1351, 0.0
        %v1424 = vmax.f32 %v1356, 0.0
        %v1425 = vmax.f32 %v1359, 0.0
        %v1426 = vpack.c.bf16 %v1363, %v1362
        %v1427 = vpack.c.bf16 %v1365, %v1364
        %v1428 = vpack.c.bf16 %v1367, %v1366
        %v1429 = vpack.c.bf16 %v1369, %v1368
        %v1430 = vpack.c.bf16 %v1371, %v1370
        %v1431 = vpack.c.bf16 %v1373, %v1372
        %v1432 = vpack.c.bf16 %v1375, %v1374
        %v1433 = vpack.c.bf16 %v1377, %v1376
        %v1434 = vpack.c.bf16 %v1379, %v1378
        %v1435 = vpack.c.bf16 %v1381, %v1380
        %v1436 = vpack.c.bf16 %v1383, %v1382
        %v1437 = vpack.c.bf16 %v1385, %v1384
        %v1438 = vpack.c.bf16 %v1387, %v1386
        %v1439 = vpack.c.bf16 %v1389, %v1388
        %v1440 = vpack.c.bf16 %v1391, %v1390
        %v1441 = vpack.c.bf16 %v1393, %v1392
        %v1442 = vpack.c.bf16 %v1395, %v1394
        %v1443 = vpack.c.bf16 %v1397, %v1396
        %v1444 = vpack.c.bf16 %v1399, %v1398
        %v1445 = vpack.c.bf16 %v1401, %v1400
        %v1446 = vpack.c.bf16 %v1403, %v1402
        %v1447 = vpack.c.bf16 %v1405, %v1404
        %v1448 = vpack.c.bf16 %v1407, %v1406
        %v1449 = vpack.c.bf16 %v1409, %v1408
        %v1450 = vpack.c.bf16 %v1411, %v1410
        %v1451 = vpack.c.bf16 %v1413, %v1412
        %v1452 = vpack.c.bf16 %v1415, %v1414
        %v1453 = vpack.c.bf16 %v1417, %v1416
        %v1454 = vpack.c.bf16 %v1419, %v1418
        %v1455 = vpack.c.bf16 %v1421, %v1420
        %v1456 = vpack.c.bf16 %v1423, %v1422
        %v1457 = vpack.c.bf16 %v1425, %v1424
        %s1458 = scalar_lea.vmem %s3, 64
        %v1459 = vld [vmem:[%s1458] sm:$0xf]
        %v1460 = vld [vmem:[%s1458 + $0x4] sm:$0xf]
        %v1461 = vld [vmem:[%s1458 + $0x8] sm:$0xf]
        %v1462 = vld [vmem:[%s1458 + $0xc] sm:$0xf]
        %v1463 = vld [vmem:[%s1458 + $0x10] sm:$0xf]
        %v1464 = vld [vmem:[%s1458 + $0x14] sm:$0xf]
        %v1465 = vld [vmem:[%s1458 + $0x18] sm:$0xf]
        %v1466 = vld [vmem:[%s1458 + $0x1c] sm:$0xf]
        %v1467 = vld [vmem:[%s1458 + $0x20] sm:$0xf]
        %v1468 = vld [vmem:[%s1458 + $0x24] sm:$0xf]
        %v1469 = vld [vmem:[%s1458 + $0x28] sm:$0xf]
        %v1470 = vld [vmem:[%s1458 + $0x2c] sm:$0xf]
        %v1471 = vld [vmem:[%s1458 + $0x30] sm:$0xf]
        %v1472 = vld [vmem:[%s1458 + $0x34] sm:$0xf]
        %v1473 = vld [vmem:[%s1458 + $0x38] sm:$0xf]
        %v1474 = vld [vmem:[%s1458 + $0x3c] sm:$0xf]
        %s1475 = scalar_lea.vmem %s4, 1
        %v1476 = vld [vmem:[%s1475] sm:$0x1]
        %v1478 = vlaneseq
        %v1479 = vshrl.u32 %v1478, 7
        %v1480 = vsub.s32 0, %v1479
        %v1481 = vrot.slane %v1476, %v1480
        %v1499 = vunpack.c.l.b16 %v1459
        %v1500 = vunpack.c.l.b16 %v1460
        %v1501 = vunpack.c.l.b16 %v1461
        %v1502 = vunpack.c.l.b16 %v1462
        %v1503 = vunpack.c.l.b16 %v1463
        %v1504 = vunpack.c.l.b16 %v1464
        %v1505 = vunpack.c.l.b16 %v1465
        %v1506 = vunpack.c.l.b16 %v1466
        %v1507 = vunpack.c.l.b16 %v1467
        %v1508 = vunpack.c.l.b16 %v1468
        %v1509 = vunpack.c.l.b16 %v1469
        %v1510 = vunpack.c.l.b16 %v1470
        %v1511 = vunpack.c.l.b16 %v1471
        %v1512 = vunpack.c.l.b16 %v1472
        %v1513 = vunpack.c.l.b16 %v1473
        %v1514 = vunpack.c.l.b16 %v1474
        %v1515 = vpack.c.b16 %v1500, %v1499
        %v1516 = vpack.c.b16 %v1502, %v1501
        %v1517 = vpack.c.b16 %v1504, %v1503
        %v1518 = vpack.c.b16 %v1506, %v1505
        %v1519 = vpack.c.b16 %v1508, %v1507
        %v1520 = vpack.c.b16 %v1510, %v1509
        %v1521 = vpack.c.b16 %v1512, %v1511
        %v1522 = vpack.c.b16 %v1514, %v1513
        %1531 = vmatprep.subr.bf16.mxu0 0
        %1532 = vmatpush1.bf16.msra.mxu0 %v1522
        %1533 = vmatprep.subr.bf16.mxu0 0
        %1534 = vmatpush1.bf16.msra.mxu0 %v1521
        %1535 = vmatprep.subr.bf16.mxu0 0
        %1536 = vmatpush1.bf16.msra.mxu0 %v1520
        %1537 = vmatprep.subr.bf16.mxu0 0
        %1538 = vmatpush1.bf16.msra.mxu0 %v1519
        %1539 = vmatprep.subr.bf16.mxu0 0
        %1540 = vmatpush1.bf16.msra.mxu0 %v1518
        %1541 = vmatprep.subr.bf16.mxu0 0
        %1542 = vmatpush1.bf16.msra.mxu0 %v1517
        %1543 = vmatprep.subr.bf16.mxu0 0
        %1544 = vmatpush1.bf16.msra.mxu0 %v1516
        %1545 = vmatprep.subr.bf16.mxu0 0
        %1546 = vmatpush1.bf16.msra.mxu0 %v1515
        %1547 = vmatprep.subr.bf16.mxu0 0
        %1548 = vmatpush2.bf16.msra.mxu0 0
        %1549 = vmatprep.subr.bf16.mxu0 0
        %1550 = vmatpush2.bf16.msra.mxu0 0
        %1551 = vmatprep.subr.bf16.mxu0 0
        %1552 = vmatpush2.bf16.msra.mxu0 0
        %1553 = vmatprep.subr.bf16.mxu0 0
        %1554 = vmatpush2.bf16.msra.mxu0 0
        %1555 = vmatprep.subr.bf16.mxu0 0
        %1556 = vmatpush2.bf16.msra.mxu0 0
        %1557 = vmatprep.subr.bf16.mxu0 0
        %1558 = vmatpush2.bf16.msra.mxu0 0
        %1559 = vmatprep.subr.bf16.mxu0 0
        %1560 = vmatpush2.bf16.msra.mxu0 0
        %1561 = vmatprep.subr.bf16.mxu0 0
        %1562 = vmatpush2.bf16.msra.mxu0 0
        %1563 = vmatprep.mubr.bf16.mxu0 0
        %1564 = vmatmul.mubr.bf16.gmra.mxu0 %v1426
        %v1565 = vpop.f32.mrf.mxu0
        %v1566 = vadd.f32 %v1481, %v1565
        %v1567 = vpop.f32.mrf.mxu0
        %v1568 = vpop.f32.mrf.mxu0
        %v1569 = vadd.f32 %v1481, %v1568
        %v1570 = vpop.f32.mrf.mxu0
        %1571 = vmatprep.mubr.bf16.mxu0 0
        %1572 = vmatmul.mubr.bf16.gmra.mxu0 %v1427
        %v1573 = vpop.f32.mrf.mxu0
        %v1574 = vadd.f32 %v1481, %v1573
        %v1575 = vpop.f32.mrf.mxu0
        %v1576 = vpop.f32.mrf.mxu0
        %v1577 = vadd.f32 %v1481, %v1576
        %v1578 = vpop.f32.mrf.mxu0
        %1579 = vmatprep.mubr.bf16.mxu0 0
        %1580 = vmatmul.mubr.bf16.gmra.mxu0 %v1428
        %v1581 = vpop.f32.mrf.mxu0
        %v1582 = vadd.f32 %v1481, %v1581
        %v1583 = vpop.f32.mrf.mxu0
        %v1584 = vpop.f32.mrf.mxu0
        %v1585 = vadd.f32 %v1481, %v1584
        %v1586 = vpop.f32.mrf.mxu0
        %1587 = vmatprep.mubr.bf16.mxu0 0
        %1588 = vmatmul.mubr.bf16.gmra.mxu0 %v1429
        %v1589 = vpop.f32.mrf.mxu0
        %v1590 = vadd.f32 %v1481, %v1589
        %v1591 = vpop.f32.mrf.mxu0
        %v1592 = vpop.f32.mrf.mxu0
        %v1593 = vadd.f32 %v1481, %v1592
        %v1594 = vpop.f32.mrf.mxu0
        %1595 = vmatprep.mubr.bf16.mxu0 0
        %1596 = vmatmul.mubr.bf16.gmra.mxu0 %v1430
        %v1597 = vpop.f32.mrf.mxu0
        %v1598 = vadd.f32 %v1481, %v1597
        %v1599 = vpop.f32.mrf.mxu0
        %v1600 = vpop.f32.mrf.mxu0
        %v1601 = vadd.f32 %v1481, %v1600
        %v1602 = vpop.f32.mrf.mxu0
        %1603 = vmatprep.mubr.bf16.mxu0 0
        %1604 = vmatmul.mubr.bf16.gmra.mxu0 %v1431
        %v1605 = vpop.f32.mrf.mxu0
        %v1606 = vadd.f32 %v1481, %v1605
        %v1607 = vpop.f32.mrf.mxu0
        %v1608 = vpop.f32.mrf.mxu0
        %v1609 = vadd.f32 %v1481, %v1608
        %v1610 = vpop.f32.mrf.mxu0
        %1611 = vmatprep.mubr.bf16.mxu0 0
        %1612 = vmatmul.mubr.bf16.gmra.mxu0 %v1432
        %v1613 = vpop.f32.mrf.mxu0
        %v1614 = vadd.f32 %v1481, %v1613
        %v1615 = vpop.f32.mrf.mxu0
        %v1616 = vpop.f32.mrf.mxu0
        %v1617 = vadd.f32 %v1481, %v1616
        %v1618 = vpop.f32.mrf.mxu0
        %1619 = vmatprep.mubr.bf16.mxu0 0
        %1620 = vmatmul.mubr.bf16.gmra.mxu0 %v1433
        %v1621 = vpop.f32.mrf.mxu0
        %v1622 = vadd.f32 %v1481, %v1621
        %v1623 = vpop.f32.mrf.mxu0
        %v1624 = vpop.f32.mrf.mxu0
        %v1625 = vadd.f32 %v1481, %v1624
        %v1626 = vpop.f32.mrf.mxu0
        %1627 = vmatprep.mubr.bf16.mxu0 0
        %1628 = vmatmul.mubr.bf16.gmra.mxu0 %v1434
        %v1629 = vpop.f32.mrf.mxu0
        %v1630 = vadd.f32 %v1481, %v1629
        %v1631 = vpop.f32.mrf.mxu0
        %v1632 = vpop.f32.mrf.mxu0
        %v1633 = vadd.f32 %v1481, %v1632
        %v1634 = vpop.f32.mrf.mxu0
        %1635 = vmatprep.mubr.bf16.mxu0 0
        %1636 = vmatmul.mubr.bf16.gmra.mxu0 %v1435
        %v1637 = vpop.f32.mrf.mxu0
        %v1638 = vadd.f32 %v1481, %v1637
        %v1639 = vpop.f32.mrf.mxu0
        %v1640 = vpop.f32.mrf.mxu0
        %v1641 = vadd.f32 %v1481, %v1640
        %v1642 = vpop.f32.mrf.mxu0
        %1643 = vmatprep.mubr.bf16.mxu0 0
        %1644 = vmatmul.mubr.bf16.gmra.mxu0 %v1436
        %v1645 = vpop.f32.mrf.mxu0
        %v1646 = vadd.f32 %v1481, %v1645
        %v1647 = vpop.f32.mrf.mxu0
        %v1648 = vpop.f32.mrf.mxu0
        %v1649 = vadd.f32 %v1481, %v1648
        %v1650 = vpop.f32.mrf.mxu0
        %1651 = vmatprep.mubr.bf16.mxu0 0
        %1652 = vmatmul.mubr.bf16.gmra.mxu0 %v1437
        %v1653 = vpop.f32.mrf.mxu0
        %v1654 = vadd.f32 %v1481, %v1653
        %v1655 = vpop.f32.mrf.mxu0
        %v1656 = vpop.f32.mrf.mxu0
        %v1657 = vadd.f32 %v1481, %v1656
        %v1658 = vpop.f32.mrf.mxu0
        %1659 = vmatprep.mubr.bf16.mxu0 0
        %1660 = vmatmul.mubr.bf16.gmra.mxu0 %v1438
        %v1661 = vpop.f32.mrf.mxu0
        %v1662 = vadd.f32 %v1481, %v1661
        %v1663 = vpop.f32.mrf.mxu0
        %v1664 = vpop.f32.mrf.mxu0
        %v1665 = vadd.f32 %v1481, %v1664
        %v1666 = vpop.f32.mrf.mxu0
        %1667 = vmatprep.mubr.bf16.mxu0 0
        %1668 = vmatmul.mubr.bf16.gmra.mxu0 %v1439
        %v1669 = vpop.f32.mrf.mxu0
        %v1670 = vadd.f32 %v1481, %v1669
        %v1671 = vpop.f32.mrf.mxu0
        %v1672 = vpop.f32.mrf.mxu0
        %v1673 = vadd.f32 %v1481, %v1672
        %v1674 = vpop.f32.mrf.mxu0
        %1675 = vmatprep.mubr.bf16.mxu0 0
        %1676 = vmatmul.mubr.bf16.gmra.mxu0 %v1440
        %v1677 = vpop.f32.mrf.mxu0
        %v1678 = vadd.f32 %v1481, %v1677
        %v1679 = vpop.f32.mrf.mxu0
        %v1680 = vpop.f32.mrf.mxu0
        %v1681 = vadd.f32 %v1481, %v1680
        %v1682 = vpop.f32.mrf.mxu0
        %1683 = vmatprep.mubr.bf16.mxu0 0
        %1684 = vmatmul.mubr.bf16.gmra.mxu0 %v1441
        %v1685 = vpop.f32.mrf.mxu0
        %v1686 = vadd.f32 %v1481, %v1685
        %v1687 = vpop.f32.mrf.mxu0
        %v1688 = vpop.f32.mrf.mxu0
        %v1689 = vadd.f32 %v1481, %v1688
        %v1690 = vpop.f32.mrf.mxu0
        %1691 = vmatprep.mubr.bf16.mxu0 0
        %1692 = vmatmul.mubr.bf16.gmra.mxu0 %v1442
        %v1693 = vpop.f32.mrf.mxu0
        %v1694 = vadd.f32 %v1481, %v1693
        %v1695 = vpop.f32.mrf.mxu0
        %v1696 = vpop.f32.mrf.mxu0
        %v1697 = vadd.f32 %v1481, %v1696
        %v1698 = vpop.f32.mrf.mxu0
        %1699 = vmatprep.mubr.bf16.mxu0 0
        %1700 = vmatmul.mubr.bf16.gmra.mxu0 %v1443
        %v1701 = vpop.f32.mrf.mxu0
        %v1702 = vadd.f32 %v1481, %v1701
        %v1703 = vpop.f32.mrf.mxu0
        %v1704 = vpop.f32.mrf.mxu0
        %v1705 = vadd.f32 %v1481, %v1704
        %v1706 = vpop.f32.mrf.mxu0
        %1707 = vmatprep.mubr.bf16.mxu0 0
        %1708 = vmatmul.mubr.bf16.gmra.mxu0 %v1444
        %v1709 = vpop.f32.mrf.mxu0
        %v1710 = vadd.f32 %v1481, %v1709
        %v1711 = vpop.f32.mrf.mxu0
        %v1712 = vpop.f32.mrf.mxu0
        %v1713 = vadd.f32 %v1481, %v1712
        %v1714 = vpop.f32.mrf.mxu0
        %1715 = vmatprep.mubr.bf16.mxu0 0
        %1716 = vmatmul.mubr.bf16.gmra.mxu0 %v1445
        %v1717 = vpop.f32.mrf.mxu0
        %v1718 = vadd.f32 %v1481, %v1717
        %v1719 = vpop.f32.mrf.mxu0
        %v1720 = vpop.f32.mrf.mxu0
        %v1721 = vadd.f32 %v1481, %v1720
        %v1722 = vpop.f32.mrf.mxu0
        %1723 = vmatprep.mubr.bf16.mxu0 0
        %1724 = vmatmul.mubr.bf16.gmra.mxu0 %v1446
        %v1725 = vpop.f32.mrf.mxu0
        %v1726 = vadd.f32 %v1481, %v1725
        %v1727 = vpop.f32.mrf.mxu0
        %v1728 = vpop.f32.mrf.mxu0
        %v1729 = vadd.f32 %v1481, %v1728
        %v1730 = vpop.f32.mrf.mxu0
        %1731 = vmatprep.mubr.bf16.mxu0 0
        %1732 = vmatmul.mubr.bf16.gmra.mxu0 %v1447
        %v1733 = vpop.f32.mrf.mxu0
        %v1734 = vadd.f32 %v1481, %v1733
        %v1735 = vpop.f32.mrf.mxu0
        %v1736 = vpop.f32.mrf.mxu0
        %v1737 = vadd.f32 %v1481, %v1736
        %v1738 = vpop.f32.mrf.mxu0
        %1739 = vmatprep.mubr.bf16.mxu0 0
        %1740 = vmatmul.mubr.bf16.gmra.mxu0 %v1448
        %v1741 = vpop.f32.mrf.mxu0
        %v1742 = vadd.f32 %v1481, %v1741
        %v1743 = vpop.f32.mrf.mxu0
        %v1744 = vpop.f32.mrf.mxu0
        %v1745 = vadd.f32 %v1481, %v1744
        %v1746 = vpop.f32.mrf.mxu0
        %1747 = vmatprep.mubr.bf16.mxu0 0
        %1748 = vmatmul.mubr.bf16.gmra.mxu0 %v1449
        %v1749 = vpop.f32.mrf.mxu0
        %v1750 = vadd.f32 %v1481, %v1749
        %v1751 = vpop.f32.mrf.mxu0
        %v1752 = vpop.f32.mrf.mxu0
        %v1753 = vadd.f32 %v1481, %v1752
        %v1754 = vpop.f32.mrf.mxu0
        %1755 = vmatprep.mubr.bf16.mxu0 0
        %1756 = vmatmul.mubr.bf16.gmra.mxu0 %v1450
        %v1757 = vpop.f32.mrf.mxu0
        %v1758 = vadd.f32 %v1481, %v1757
        %v1759 = vpop.f32.mrf.mxu0
        %v1760 = vpop.f32.mrf.mxu0
        %v1761 = vadd.f32 %v1481, %v1760
        %v1762 = vpop.f32.mrf.mxu0
        %1763 = vmatprep.mubr.bf16.mxu0 0
        %1764 = vmatmul.mubr.bf16.gmra.mxu0 %v1451
        %v1765 = vpop.f32.mrf.mxu0
        %v1766 = vadd.f32 %v1481, %v1765
        %v1767 = vpop.f32.mrf.mxu0
        %v1768 = vpop.f32.mrf.mxu0
        %v1769 = vadd.f32 %v1481, %v1768
        %v1770 = vpop.f32.mrf.mxu0
        %1771 = vmatprep.mubr.bf16.mxu0 0
        %1772 = vmatmul.mubr.bf16.gmra.mxu0 %v1452
        %v1773 = vpop.f32.mrf.mxu0
        %v1774 = vadd.f32 %v1481, %v1773
        %v1775 = vpop.f32.mrf.mxu0
        %v1776 = vpop.f32.mrf.mxu0
        %v1777 = vadd.f32 %v1481, %v1776
        %v1778 = vpop.f32.mrf.mxu0
        %1779 = vmatprep.mubr.bf16.mxu0 0
        %1780 = vmatmul.mubr.bf16.gmra.mxu0 %v1453
        %v1781 = vpop.f32.mrf.mxu0
        %v1782 = vadd.f32 %v1481, %v1781
        %v1783 = vpop.f32.mrf.mxu0
        %v1784 = vpop.f32.mrf.mxu0
        %v1785 = vadd.f32 %v1481, %v1784
        %v1786 = vpop.f32.mrf.mxu0
        %1787 = vmatprep.mubr.bf16.mxu0 0
        %1788 = vmatmul.mubr.bf16.gmra.mxu0 %v1454
        %v1789 = vpop.f32.mrf.mxu0
        %v1790 = vadd.f32 %v1481, %v1789
        %v1791 = vpop.f32.mrf.mxu0
        %v1792 = vpop.f32.mrf.mxu0
        %v1793 = vadd.f32 %v1481, %v1792
        %v1794 = vpop.f32.mrf.mxu0
        %1795 = vmatprep.mubr.bf16.mxu0 0
        %1796 = vmatmul.mubr.bf16.gmra.mxu0 %v1455
        %v1797 = vpop.f32.mrf.mxu0
        %v1798 = vadd.f32 %v1481, %v1797
        %v1799 = vpop.f32.mrf.mxu0
        %v1800 = vpop.f32.mrf.mxu0
        %v1801 = vadd.f32 %v1481, %v1800
        %v1802 = vpop.f32.mrf.mxu0
        %1803 = vmatprep.mubr.bf16.mxu0 0
        %1804 = vmatmul.mubr.bf16.gmra.mxu0 %v1456
        %v1805 = vpop.f32.mrf.mxu0
        %v1806 = vadd.f32 %v1481, %v1805
        %v1807 = vpop.f32.mrf.mxu0
        %v1808 = vpop.f32.mrf.mxu0
        %v1809 = vadd.f32 %v1481, %v1808
        %v1810 = vpop.f32.mrf.mxu0
        %1811 = vmatprep.mubr.bf16.mxu0 0
        %1812 = vmatmul.mubr.bf16.gmra.mxu0 %v1457
        %v1813 = vpop.f32.mrf.mxu0
        %v1814 = vadd.f32 %v1481, %v1813
        %v1815 = vpop.f32.mrf.mxu0
        %v1816 = vpop.f32.mrf.mxu0
        %v1817 = vadd.f32 %v1481, %v1816
        %v1818 = vpop.f32.mrf.mxu0
        %1819 = vdwg.mxu0
        %v1820 = vmax.f32 %v1566, 0.0
        %v1821 = vmax.f32 %v1569, 0.0
        %v1822 = vmax.f32 %v1574, 0.0
        %v1823 = vmax.f32 %v1577, 0.0
        %v1824 = vmax.f32 %v1582, 0.0
        %v1825 = vmax.f32 %v1585, 0.0
        %v1826 = vmax.f32 %v1590, 0.0
        %v1827 = vmax.f32 %v1593, 0.0
        %v1828 = vmax.f32 %v1598, 0.0
        %v1829 = vmax.f32 %v1601, 0.0
        %v1830 = vmax.f32 %v1606, 0.0
        %v1831 = vmax.f32 %v1609, 0.0
        %v1832 = vmax.f32 %v1614, 0.0
        %v1833 = vmax.f32 %v1617, 0.0
        %v1834 = vmax.f32 %v1622, 0.0
        %v1835 = vmax.f32 %v1625, 0.0
        %v1836 = vmax.f32 %v1630, 0.0
        %v1837 = vmax.f32 %v1633, 0.0
        %v1838 = vmax.f32 %v1638, 0.0
        %v1839 = vmax.f32 %v1641, 0.0
        %v1840 = vmax.f32 %v1646, 0.0
        %v1841 = vmax.f32 %v1649, 0.0
        %v1842 = vmax.f32 %v1654, 0.0
        %v1843 = vmax.f32 %v1657, 0.0
        %v1844 = vmax.f32 %v1662, 0.0
        %v1845 = vmax.f32 %v1665, 0.0
        %v1846 = vmax.f32 %v1670, 0.0
        %v1847 = vmax.f32 %v1673, 0.0
        %v1848 = vmax.f32 %v1678, 0.0
        %v1849 = vmax.f32 %v1681, 0.0
        %v1850 = vmax.f32 %v1686, 0.0
        %v1851 = vmax.f32 %v1689, 0.0
        %v1852 = vmax.f32 %v1694, 0.0
        %v1853 = vmax.f32 %v1697, 0.0
        %v1854 = vmax.f32 %v1702, 0.0
        %v1855 = vmax.f32 %v1705, 0.0
        %v1856 = vmax.f32 %v1710, 0.0
        %v1857 = vmax.f32 %v1713, 0.0
        %v1858 = vmax.f32 %v1718, 0.0
        %v1859 = vmax.f32 %v1721, 0.0
        %v1860 = vmax.f32 %v1726, 0.0
        %v1861 = vmax.f32 %v1729, 0.0
        %v1862 = vmax.f32 %v1734, 0.0
        %v1863 = vmax.f32 %v1737, 0.0
        %v1864 = vmax.f32 %v1742, 0.0
        %v1865 = vmax.f32 %v1745, 0.0
        %v1866 = vmax.f32 %v1750, 0.0
        %v1867 = vmax.f32 %v1753, 0.0
        %v1868 = vmax.f32 %v1758, 0.0
        %v1869 = vmax.f32 %v1761, 0.0
        %v1870 = vmax.f32 %v1766, 0.0
        %v1871 = vmax.f32 %v1769, 0.0
        %v1872 = vmax.f32 %v1774, 0.0
        %v1873 = vmax.f32 %v1777, 0.0
        %v1874 = vmax.f32 %v1782, 0.0
        %v1875 = vmax.f32 %v1785, 0.0
        %v1876 = vmax.f32 %v1790, 0.0
        %v1877 = vmax.f32 %v1793, 0.0
        %v1878 = vmax.f32 %v1798, 0.0
        %v1879 = vmax.f32 %v1801, 0.0
        %v1880 = vmax.f32 %v1806, 0.0
        %v1881 = vmax.f32 %v1809, 0.0
        %v1882 = vmax.f32 %v1814, 0.0
        %v1883 = vmax.f32 %v1817, 0.0
        %v1884 = vpack.c.bf16 %v1821, %v1820
        %v1885 = vpack.c.bf16 %v1823, %v1822
        %v1886 = vpack.c.bf16 %v1825, %v1824
        %v1887 = vpack.c.bf16 %v1827, %v1826
        %v1888 = vpack.c.bf16 %v1829, %v1828
        %v1889 = vpack.c.bf16 %v1831, %v1830
        %v1890 = vpack.c.bf16 %v1833, %v1832
        %v1891 = vpack.c.bf16 %v1835, %v1834
        %v1892 = vpack.c.bf16 %v1837, %v1836
        %v1893 = vpack.c.bf16 %v1839, %v1838
        %v1894 = vpack.c.bf16 %v1841, %v1840
        %v1895 = vpack.c.bf16 %v1843, %v1842
        %v1896 = vpack.c.bf16 %v1845, %v1844
        %v1897 = vpack.c.bf16 %v1847, %v1846
        %v1898 = vpack.c.bf16 %v1849, %v1848
        %v1899 = vpack.c.bf16 %v1851, %v1850
        %v1900 = vpack.c.bf16 %v1853, %v1852
        %v1901 = vpack.c.bf16 %v1855, %v1854
        %v1902 = vpack.c.bf16 %v1857, %v1856
        %v1903 = vpack.c.bf16 %v1859, %v1858
        %v1904 = vpack.c.bf16 %v1861, %v1860
        %v1905 = vpack.c.bf16 %v1863, %v1862
        %v1906 = vpack.c.bf16 %v1865, %v1864
        %v1907 = vpack.c.bf16 %v1867, %v1866
        %v1908 = vpack.c.bf16 %v1869, %v1868
        %v1909 = vpack.c.bf16 %v1871, %v1870
        %v1910 = vpack.c.bf16 %v1873, %v1872
        %v1911 = vpack.c.bf16 %v1875, %v1874
        %v1912 = vpack.c.bf16 %v1877, %v1876
        %v1913 = vpack.c.bf16 %v1879, %v1878
        %v1914 = vpack.c.bf16 %v1881, %v1880
        %v1915 = vpack.c.bf16 %v1883, %v1882
        %v1916 = vld [vmem:[%s5] sm:$0xf]
        %v1917 = vld [vmem:[%s5 + $0x4] sm:$0xf]
        %v1918 = vld [vmem:[%s5 + $0x8] sm:$0xf]
        %v1919 = vld [vmem:[%s5 + $0xc] sm:$0xf]
        %v1920 = vld [vmem:[%s5 + $0x10] sm:$0xf]
        %v1921 = vld [vmem:[%s5 + $0x14] sm:$0xf]
        %v1922 = vld [vmem:[%s5 + $0x18] sm:$0xf]
        %v1923 = vld [vmem:[%s5 + $0x1c] sm:$0xf]
        %v1924 = vld [vmem:[%s5 + $0x20] sm:$0xf]
        %v1925 = vld [vmem:[%s5 + $0x24] sm:$0xf]
        %v1926 = vld [vmem:[%s5 + $0x28] sm:$0xf]
        %v1927 = vld [vmem:[%s5 + $0x2c] sm:$0xf]
        %v1928 = vld [vmem:[%s5 + $0x30] sm:$0xf]
        %v1929 = vld [vmem:[%s5 + $0x34] sm:$0xf]
        %v1930 = vld [vmem:[%s5 + $0x38] sm:$0xf]
        %v1931 = vld [vmem:[%s5 + $0x3c] sm:$0xf]
        %v1932 = vld [vmem:[%s6] sm:$0x1]
        %v1934 = vlaneseq
        %v1935 = vshrl.u32 %v1934, 7
        %v1936 = vsub.s32 0, %v1935
        %v1937 = vrot.slane %v1932, %v1936
        %v1955 = vunpack.c.l.b16 %v1916
        %v1956 = vunpack.c.l.b16 %v1917
        %v1957 = vunpack.c.l.b16 %v1918
        %v1958 = vunpack.c.l.b16 %v1919
        %v1959 = vunpack.c.l.b16 %v1920
        %v1960 = vunpack.c.l.b16 %v1921
        %v1961 = vunpack.c.l.b16 %v1922
        %v1962 = vunpack.c.l.b16 %v1923
        %v1963 = vunpack.c.l.b16 %v1924
        %v1964 = vunpack.c.l.b16 %v1925
        %v1965 = vunpack.c.l.b16 %v1926
        %v1966 = vunpack.c.l.b16 %v1927
        %v1967 = vunpack.c.l.b16 %v1928
        %v1968 = vunpack.c.l.b16 %v1929
        %v1969 = vunpack.c.l.b16 %v1930
        %v1970 = vunpack.c.l.b16 %v1931
        %v1971 = vpack.c.b16 %v1956, %v1955
        %v1972 = vpack.c.b16 %v1958, %v1957
        %v1973 = vpack.c.b16 %v1960, %v1959
        %v1974 = vpack.c.b16 %v1962, %v1961
        %v1975 = vpack.c.b16 %v1964, %v1963
        %v1976 = vpack.c.b16 %v1966, %v1965
        %v1977 = vpack.c.b16 %v1968, %v1967
        %v1978 = vpack.c.b16 %v1970, %v1969
        %1987 = vmatprep.subr.bf16.mxu0 0
        %1988 = vmatpush1.bf16.msra.mxu0 %v1978
        %1989 = vmatprep.subr.bf16.mxu0 0
        %1990 = vmatpush1.bf16.msra.mxu0 %v1977
        %1991 = vmatprep.subr.bf16.mxu0 0
        %1992 = vmatpush1.bf16.msra.mxu0 %v1976
        %1993 = vmatprep.subr.bf16.mxu0 0
        %1994 = vmatpush1.bf16.msra.mxu0 %v1975
        %1995 = vmatprep.subr.bf16.mxu0 0
        %1996 = vmatpush1.bf16.msra.mxu0 %v1974
        %1997 = vmatprep.subr.bf16.mxu0 0
        %1998 = vmatpush1.bf16.msra.mxu0 %v1973
        %1999 = vmatprep.subr.bf16.mxu0 0
        %2000 = vmatpush1.bf16.msra.mxu0 %v1972
        %2001 = vmatprep.subr.bf16.mxu0 0
        %2002 = vmatpush1.bf16.msra.mxu0 %v1971
        %2003 = vmatprep.subr.bf16.mxu0 0
        %2004 = vmatpush2.bf16.msra.mxu0 0
        %2005 = vmatprep.subr.bf16.mxu0 0
        %2006 = vmatpush2.bf16.msra.mxu0 0
        %2007 = vmatprep.subr.bf16.mxu0 0
        %2008 = vmatpush2.bf16.msra.mxu0 0
        %2009 = vmatprep.subr.bf16.mxu0 0
        %2010 = vmatpush2.bf16.msra.mxu0 0
        %2011 = vmatprep.subr.bf16.mxu0 0
        %2012 = vmatpush2.bf16.msra.mxu0 0
        %2013 = vmatprep.subr.bf16.mxu0 0
        %2014 = vmatpush2.bf16.msra.mxu0 0
        %2015 = vmatprep.subr.bf16.mxu0 0
        %2016 = vmatpush2.bf16.msra.mxu0 0
        %2017 = vmatprep.subr.bf16.mxu0 0
        %2018 = vmatpush2.bf16.msra.mxu0 0
        %2019 = vmatprep.mubr.bf16.mxu0 0
        %2020 = vmatmul.mubr.bf16.gmra.mxu0 %v1884
        %v2021 = vpop.f32.mrf.mxu0
        %v2022 = vadd.f32 %v1937, %v2021
        %v2023 = vpop.f32.mrf.mxu0
        %v2024 = vpop.f32.mrf.mxu0
        %v2025 = vadd.f32 %v1937, %v2024
        %v2026 = vpop.f32.mrf.mxu0
        %2027 = vmatprep.mubr.bf16.mxu0 0
        %2028 = vmatmul.mubr.bf16.gmra.mxu0 %v1885
        %v2029 = vpop.f32.mrf.mxu0
        %v2030 = vadd.f32 %v1937, %v2029
        %v2031 = vpop.f32.mrf.mxu0
        %v2032 = vpop.f32.mrf.mxu0
        %v2033 = vadd.f32 %v1937, %v2032
        %v2034 = vpop.f32.mrf.mxu0
        %2035 = vmatprep.mubr.bf16.mxu0 0
        %2036 = vmatmul.mubr.bf16.gmra.mxu0 %v1886
        %v2037 = vpop.f32.mrf.mxu0
        %v2038 = vadd.f32 %v1937, %v2037
        %v2039 = vpop.f32.mrf.mxu0
        %v2040 = vpop.f32.mrf.mxu0
        %v2041 = vadd.f32 %v1937, %v2040
        %v2042 = vpop.f32.mrf.mxu0
        %2043 = vmatprep.mubr.bf16.mxu0 0
        %2044 = vmatmul.mubr.bf16.gmra.mxu0 %v1887
        %v2045 = vpop.f32.mrf.mxu0
        %v2046 = vadd.f32 %v1937, %v2045
        %v2047 = vpop.f32.mrf.mxu0
        %v2048 = vpop.f32.mrf.mxu0
        %v2049 = vadd.f32 %v1937, %v2048
        %v2050 = vpop.f32.mrf.mxu0
        %2051 = vmatprep.mubr.bf16.mxu0 0
        %2052 = vmatmul.mubr.bf16.gmra.mxu0 %v1888
        %v2053 = vpop.f32.mrf.mxu0
        %v2054 = vadd.f32 %v1937, %v2053
        %v2055 = vpop.f32.mrf.mxu0
        %v2056 = vpop.f32.mrf.mxu0
        %v2057 = vadd.f32 %v1937, %v2056
        %v2058 = vpop.f32.mrf.mxu0
        %2059 = vmatprep.mubr.bf16.mxu0 0
        %2060 = vmatmul.mubr.bf16.gmra.mxu0 %v1889
        %v2061 = vpop.f32.mrf.mxu0
        %v2062 = vadd.f32 %v1937, %v2061
        %v2063 = vpop.f32.mrf.mxu0
        %v2064 = vpop.f32.mrf.mxu0
        %v2065 = vadd.f32 %v1937, %v2064
        %v2066 = vpop.f32.mrf.mxu0
        %2067 = vmatprep.mubr.bf16.mxu0 0
        %2068 = vmatmul.mubr.bf16.gmra.mxu0 %v1890
        %v2069 = vpop.f32.mrf.mxu0
        %v2070 = vadd.f32 %v1937, %v2069
        %v2071 = vpop.f32.mrf.mxu0
        %v2072 = vpop.f32.mrf.mxu0
        %v2073 = vadd.f32 %v1937, %v2072
        %v2074 = vpop.f32.mrf.mxu0
        %2075 = vmatprep.mubr.bf16.mxu0 0
        %2076 = vmatmul.mubr.bf16.gmra.mxu0 %v1891
        %v2077 = vpop.f32.mrf.mxu0
        %v2078 = vadd.f32 %v1937, %v2077
        %v2079 = vpop.f32.mrf.mxu0
        %v2080 = vpop.f32.mrf.mxu0
        %v2081 = vadd.f32 %v1937, %v2080
        %v2082 = vpop.f32.mrf.mxu0
        %2083 = vmatprep.mubr.bf16.mxu0 0
        %2084 = vmatmul.mubr.bf16.gmra.mxu0 %v1892
        %v2085 = vpop.f32.mrf.mxu0
        %v2086 = vadd.f32 %v1937, %v2085
        %v2087 = vpop.f32.mrf.mxu0
        %v2088 = vpop.f32.mrf.mxu0
        %v2089 = vadd.f32 %v1937, %v2088
        %v2090 = vpop.f32.mrf.mxu0
        %2091 = vmatprep.mubr.bf16.mxu0 0
        %2092 = vmatmul.mubr.bf16.gmra.mxu0 %v1893
        %v2093 = vpop.f32.mrf.mxu0
        %v2094 = vadd.f32 %v1937, %v2093
        %v2095 = vpop.f32.mrf.mxu0
        %v2096 = vpop.f32.mrf.mxu0
        %v2097 = vadd.f32 %v1937, %v2096
        %v2098 = vpop.f32.mrf.mxu0
        %2099 = vmatprep.mubr.bf16.mxu0 0
        %2100 = vmatmul.mubr.bf16.gmra.mxu0 %v1894
        %v2101 = vpop.f32.mrf.mxu0
        %v2102 = vadd.f32 %v1937, %v2101
        %v2103 = vpop.f32.mrf.mxu0
        %v2104 = vpop.f32.mrf.mxu0
        %v2105 = vadd.f32 %v1937, %v2104
        %v2106 = vpop.f32.mrf.mxu0
        %2107 = vmatprep.mubr.bf16.mxu0 0
        %2108 = vmatmul.mubr.bf16.gmra.mxu0 %v1895
        %v2109 = vpop.f32.mrf.mxu0
        %v2110 = vadd.f32 %v1937, %v2109
        %v2111 = vpop.f32.mrf.mxu0
        %v2112 = vpop.f32.mrf.mxu0
        %v2113 = vadd.f32 %v1937, %v2112
        %v2114 = vpop.f32.mrf.mxu0
        %2115 = vmatprep.mubr.bf16.mxu0 0
        %2116 = vmatmul.mubr.bf16.gmra.mxu0 %v1896
        %v2117 = vpop.f32.mrf.mxu0
        %v2118 = vadd.f32 %v1937, %v2117
        %v2119 = vpop.f32.mrf.mxu0
        %v2120 = vpop.f32.mrf.mxu0
        %v2121 = vadd.f32 %v1937, %v2120
        %v2122 = vpop.f32.mrf.mxu0
        %2123 = vmatprep.mubr.bf16.mxu0 0
        %2124 = vmatmul.mubr.bf16.gmra.mxu0 %v1897
        %v2125 = vpop.f32.mrf.mxu0
        %v2126 = vadd.f32 %v1937, %v2125
        %v2127 = vpop.f32.mrf.mxu0
        %v2128 = vpop.f32.mrf.mxu0
        %v2129 = vadd.f32 %v1937, %v2128
        %v2130 = vpop.f32.mrf.mxu0
        %2131 = vmatprep.mubr.bf16.mxu0 0
        %2132 = vmatmul.mubr.bf16.gmra.mxu0 %v1898
        %v2133 = vpop.f32.mrf.mxu0
        %v2134 = vadd.f32 %v1937, %v2133
        %v2135 = vpop.f32.mrf.mxu0
        %v2136 = vpop.f32.mrf.mxu0
        %v2137 = vadd.f32 %v1937, %v2136
        %v2138 = vpop.f32.mrf.mxu0
        %2139 = vmatprep.mubr.bf16.mxu0 0
        %2140 = vmatmul.mubr.bf16.gmra.mxu0 %v1899
        %v2141 = vpop.f32.mrf.mxu0
        %v2142 = vadd.f32 %v1937, %v2141
        %v2143 = vpop.f32.mrf.mxu0
        %v2144 = vpop.f32.mrf.mxu0
        %v2145 = vadd.f32 %v1937, %v2144
        %v2146 = vpop.f32.mrf.mxu0
        %2147 = vmatprep.mubr.bf16.mxu0 0
        %2148 = vmatmul.mubr.bf16.gmra.mxu0 %v1900
        %v2149 = vpop.f32.mrf.mxu0
        %v2150 = vadd.f32 %v1937, %v2149
        %v2151 = vpop.f32.mrf.mxu0
        %v2152 = vpop.f32.mrf.mxu0
        %v2153 = vadd.f32 %v1937, %v2152
        %v2154 = vpop.f32.mrf.mxu0
        %2155 = vmatprep.mubr.bf16.mxu0 0
        %2156 = vmatmul.mubr.bf16.gmra.mxu0 %v1901
        %v2157 = vpop.f32.mrf.mxu0
        %v2158 = vadd.f32 %v1937, %v2157
        %v2159 = vpop.f32.mrf.mxu0
        %v2160 = vpop.f32.mrf.mxu0
        %v2161 = vadd.f32 %v1937, %v2160
        %v2162 = vpop.f32.mrf.mxu0
        %2163 = vmatprep.mubr.bf16.mxu0 0
        %2164 = vmatmul.mubr.bf16.gmra.mxu0 %v1902
        %v2165 = vpop.f32.mrf.mxu0
        %v2166 = vadd.f32 %v1937, %v2165
        %v2167 = vpop.f32.mrf.mxu0
        %v2168 = vpop.f32.mrf.mxu0
        %v2169 = vadd.f32 %v1937, %v2168
        %v2170 = vpop.f32.mrf.mxu0
        %2171 = vmatprep.mubr.bf16.mxu0 0
        %2172 = vmatmul.mubr.bf16.gmra.mxu0 %v1903
        %v2173 = vpop.f32.mrf.mxu0
        %v2174 = vadd.f32 %v1937, %v2173
        %v2175 = vpop.f32.mrf.mxu0
        %v2176 = vpop.f32.mrf.mxu0
        %v2177 = vadd.f32 %v1937, %v2176
        %v2178 = vpop.f32.mrf.mxu0
        %2179 = vmatprep.mubr.bf16.mxu0 0
        %2180 = vmatmul.mubr.bf16.gmra.mxu0 %v1904
        %v2181 = vpop.f32.mrf.mxu0
        %v2182 = vadd.f32 %v1937, %v2181
        %v2183 = vpop.f32.mrf.mxu0
        %v2184 = vpop.f32.mrf.mxu0
        %v2185 = vadd.f32 %v1937, %v2184
        %v2186 = vpop.f32.mrf.mxu0
        %2187 = vmatprep.mubr.bf16.mxu0 0
        %2188 = vmatmul.mubr.bf16.gmra.mxu0 %v1905
        %v2189 = vpop.f32.mrf.mxu0
        %v2190 = vadd.f32 %v1937, %v2189
        %v2191 = vpop.f32.mrf.mxu0
        %v2192 = vpop.f32.mrf.mxu0
        %v2193 = vadd.f32 %v1937, %v2192
        %v2194 = vpop.f32.mrf.mxu0
        %2195 = vmatprep.mubr.bf16.mxu0 0
        %2196 = vmatmul.mubr.bf16.gmra.mxu0 %v1906
        %v2197 = vpop.f32.mrf.mxu0
        %v2198 = vadd.f32 %v1937, %v2197
        %v2199 = vpop.f32.mrf.mxu0
        %v2200 = vpop.f32.mrf.mxu0
        %v2201 = vadd.f32 %v1937, %v2200
        %v2202 = vpop.f32.mrf.mxu0
        %2203 = vmatprep.mubr.bf16.mxu0 0
        %2204 = vmatmul.mubr.bf16.gmra.mxu0 %v1907
        %v2205 = vpop.f32.mrf.mxu0
        %v2206 = vadd.f32 %v1937, %v2205
        %v2207 = vpop.f32.mrf.mxu0
        %v2208 = vpop.f32.mrf.mxu0
        %v2209 = vadd.f32 %v1937, %v2208
        %v2210 = vpop.f32.mrf.mxu0
        %2211 = vmatprep.mubr.bf16.mxu0 0
        %2212 = vmatmul.mubr.bf16.gmra.mxu0 %v1908
        %v2213 = vpop.f32.mrf.mxu0
        %v2214 = vadd.f32 %v1937, %v2213
        %v2215 = vpop.f32.mrf.mxu0
        %v2216 = vpop.f32.mrf.mxu0
        %v2217 = vadd.f32 %v1937, %v2216
        %v2218 = vpop.f32.mrf.mxu0
        %2219 = vmatprep.mubr.bf16.mxu0 0
        %2220 = vmatmul.mubr.bf16.gmra.mxu0 %v1909
        %v2221 = vpop.f32.mrf.mxu0
        %v2222 = vadd.f32 %v1937, %v2221
        %v2223 = vpop.f32.mrf.mxu0
        %v2224 = vpop.f32.mrf.mxu0
        %v2225 = vadd.f32 %v1937, %v2224
        %v2226 = vpop.f32.mrf.mxu0
        %2227 = vmatprep.mubr.bf16.mxu0 0
        %2228 = vmatmul.mubr.bf16.gmra.mxu0 %v1910
        %v2229 = vpop.f32.mrf.mxu0
        %v2230 = vadd.f32 %v1937, %v2229
        %v2231 = vpop.f32.mrf.mxu0
        %v2232 = vpop.f32.mrf.mxu0
        %v2233 = vadd.f32 %v1937, %v2232
        %v2234 = vpop.f32.mrf.mxu0
        %2235 = vmatprep.mubr.bf16.mxu0 0
        %2236 = vmatmul.mubr.bf16.gmra.mxu0 %v1911
        %v2237 = vpop.f32.mrf.mxu0
        %v2238 = vadd.f32 %v1937, %v2237
        %v2239 = vpop.f32.mrf.mxu0
        %v2240 = vpop.f32.mrf.mxu0
        %v2241 = vadd.f32 %v1937, %v2240
        %v2242 = vpop.f32.mrf.mxu0
        %2243 = vmatprep.mubr.bf16.mxu0 0
        %2244 = vmatmul.mubr.bf16.gmra.mxu0 %v1912
        %v2245 = vpop.f32.mrf.mxu0
        %v2246 = vadd.f32 %v1937, %v2245
        %v2247 = vpop.f32.mrf.mxu0
        %v2248 = vpop.f32.mrf.mxu0
        %v2249 = vadd.f32 %v1937, %v2248
        %v2250 = vpop.f32.mrf.mxu0
        %2251 = vmatprep.mubr.bf16.mxu0 0
        %2252 = vmatmul.mubr.bf16.gmra.mxu0 %v1913
        %v2253 = vpop.f32.mrf.mxu0
        %v2254 = vadd.f32 %v1937, %v2253
        %v2255 = vpop.f32.mrf.mxu0
        %v2256 = vpop.f32.mrf.mxu0
        %v2257 = vadd.f32 %v1937, %v2256
        %v2258 = vpop.f32.mrf.mxu0
        %2259 = vmatprep.mubr.bf16.mxu0 0
        %2260 = vmatmul.mubr.bf16.gmra.mxu0 %v1914
        %v2261 = vpop.f32.mrf.mxu0
        %v2262 = vadd.f32 %v1937, %v2261
        %v2263 = vpop.f32.mrf.mxu0
        %v2264 = vpop.f32.mrf.mxu0
        %v2265 = vadd.f32 %v1937, %v2264
        %v2266 = vpop.f32.mrf.mxu0
        %2267 = vmatprep.mubr.bf16.mxu0 0
        %2268 = vmatmul.mubr.bf16.gmra.mxu0 %v1915
        %v2269 = vpop.f32.mrf.mxu0
        %v2270 = vadd.f32 %v1937, %v2269
        %v2271 = vpop.f32.mrf.mxu0
        %v2272 = vpop.f32.mrf.mxu0
        %v2273 = vadd.f32 %v1937, %v2272
        %v2274 = vpop.f32.mrf.mxu0
        %2275 = vdwg.mxu0
        %v2276 = vmul.f32 %v2022, 5.0
        %v2277 = vmul.f32 %v2025, 5.0
        %v2278 = vmul.f32 %v2030, 5.0
        %v2279 = vmul.f32 %v2033, 5.0
        %v2280 = vmul.f32 %v2038, 5.0
        %v2281 = vmul.f32 %v2041, 5.0
        %v2282 = vmul.f32 %v2046, 5.0
        %v2283 = vmul.f32 %v2049, 5.0
        %v2284 = vmul.f32 %v2054, 5.0
        %v2285 = vmul.f32 %v2057, 5.0
        %v2286 = vmul.f32 %v2062, 5.0
        %v2287 = vmul.f32 %v2065, 5.0
        %v2288 = vmul.f32 %v2070, 5.0
        %v2289 = vmul.f32 %v2073, 5.0
        %v2290 = vmul.f32 %v2078, 5.0
        %v2291 = vmul.f32 %v2081, 5.0
        %v2292 = vmul.f32 %v2086, 5.0
        %v2293 = vmul.f32 %v2089, 5.0
        %v2294 = vmul.f32 %v2094, 5.0
        %v2295 = vmul.f32 %v2097, 5.0
        %v2296 = vmul.f32 %v2102, 5.0
        %v2297 = vmul.f32 %v2105, 5.0
        %v2298 = vmul.f32 %v2110, 5.0
        %v2299 = vmul.f32 %v2113, 5.0
        %v2300 = vmul.f32 %v2118, 5.0
        %v2301 = vmul.f32 %v2121, 5.0
        %v2302 = vmul.f32 %v2126, 5.0
        %v2303 = vmul.f32 %v2129, 5.0
        %v2304 = vmul.f32 %v2134, 5.0
        %v2305 = vmul.f32 %v2137, 5.0
        %v2306 = vmul.f32 %v2142, 5.0
        %v2307 = vmul.f32 %v2145, 5.0
        %v2308 = vmul.f32 %v2150, 5.0
        %v2309 = vmul.f32 %v2153, 5.0
        %v2310 = vmul.f32 %v2158, 5.0
        %v2311 = vmul.f32 %v2161, 5.0
        %v2312 = vmul.f32 %v2166, 5.0
        %v2313 = vmul.f32 %v2169, 5.0
        %v2314 = vmul.f32 %v2174, 5.0
        %v2315 = vmul.f32 %v2177, 5.0
        %v2316 = vmul.f32 %v2182, 5.0
        %v2317 = vmul.f32 %v2185, 5.0
        %v2318 = vmul.f32 %v2190, 5.0
        %v2319 = vmul.f32 %v2193, 5.0
        %v2320 = vmul.f32 %v2198, 5.0
        %v2321 = vmul.f32 %v2201, 5.0
        %v2322 = vmul.f32 %v2206, 5.0
        %v2323 = vmul.f32 %v2209, 5.0
        %v2324 = vmul.f32 %v2214, 5.0
        %v2325 = vmul.f32 %v2217, 5.0
        %v2326 = vmul.f32 %v2222, 5.0
        %v2327 = vmul.f32 %v2225, 5.0
        %v2328 = vmul.f32 %v2230, 5.0
        %v2329 = vmul.f32 %v2233, 5.0
        %v2330 = vmul.f32 %v2238, 5.0
        %v2331 = vmul.f32 %v2241, 5.0
        %v2332 = vmul.f32 %v2246, 5.0
        %v2333 = vmul.f32 %v2249, 5.0
        %v2334 = vmul.f32 %v2254, 5.0
        %v2335 = vmul.f32 %v2257, 5.0
        %v2336 = vmul.f32 %v2262, 5.0
        %v2337 = vmul.f32 %v2265, 5.0
        %v2338 = vmul.f32 %v2270, 5.0
        %v2339 = vmul.f32 %v2273, 5.0
        %v2340 = vxor.u32 %v2276, 2147483648
        %v2341 = vxor.u32 %v2277, 2147483648
        %v2342 = vxor.u32 %v2278, 2147483648
        %v2343 = vxor.u32 %v2279, 2147483648
        %v2344 = vxor.u32 %v2280, 2147483648
        %v2345 = vxor.u32 %v2281, 2147483648
        %v2346 = vxor.u32 %v2282, 2147483648
        %v2347 = vxor.u32 %v2283, 2147483648
        %v2348 = vxor.u32 %v2284, 2147483648
        %v2349 = vxor.u32 %v2285, 2147483648
        %v2350 = vxor.u32 %v2286, 2147483648
        %v2351 = vxor.u32 %v2287, 2147483648
        %v2352 = vxor.u32 %v2288, 2147483648
        %v2353 = vxor.u32 %v2289, 2147483648
        %v2354 = vxor.u32 %v2290, 2147483648
        %v2355 = vxor.u32 %v2291, 2147483648
        %v2356 = vxor.u32 %v2292, 2147483648
        %v2357 = vxor.u32 %v2293, 2147483648
        %v2358 = vxor.u32 %v2294, 2147483648
        %v2359 = vxor.u32 %v2295, 2147483648
        %v2360 = vxor.u32 %v2296, 2147483648
        %v2361 = vxor.u32 %v2297, 2147483648
        %v2362 = vxor.u32 %v2298, 2147483648
        %v2363 = vxor.u32 %v2299, 2147483648
        %v2364 = vxor.u32 %v2300, 2147483648
        %v2365 = vxor.u32 %v2301, 2147483648
        %v2366 = vxor.u32 %v2302, 2147483648
        %v2367 = vxor.u32 %v2303, 2147483648
        %v2368 = vxor.u32 %v2304, 2147483648
        %v2369 = vxor.u32 %v2305, 2147483648
        %v2370 = vxor.u32 %v2306, 2147483648
        %v2371 = vxor.u32 %v2307, 2147483648
        %v2372 = vxor.u32 %v2308, 2147483648
        %v2373 = vxor.u32 %v2309, 2147483648
        %v2374 = vxor.u32 %v2310, 2147483648
        %v2375 = vxor.u32 %v2311, 2147483648
        %v2376 = vxor.u32 %v2312, 2147483648
        %v2377 = vxor.u32 %v2313, 2147483648
        %v2378 = vxor.u32 %v2314, 2147483648
        %v2379 = vxor.u32 %v2315, 2147483648
        %v2380 = vxor.u32 %v2316, 2147483648
        %v2381 = vxor.u32 %v2317, 2147483648
        %v2382 = vxor.u32 %v2318, 2147483648
        %v2383 = vxor.u32 %v2319, 2147483648
        %v2384 = vxor.u32 %v2320, 2147483648
        %v2385 = vxor.u32 %v2321, 2147483648
        %v2386 = vxor.u32 %v2322, 2147483648
        %v2387 = vxor.u32 %v2323, 2147483648
        %v2388 = vxor.u32 %v2324, 2147483648
        %v2389 = vxor.u32 %v2325, 2147483648
        %v2390 = vxor.u32 %v2326, 2147483648
        %v2391 = vxor.u32 %v2327, 2147483648
        %v2392 = vxor.u32 %v2328, 2147483648
        %v2393 = vxor.u32 %v2329, 2147483648
        %v2394 = vxor.u32 %v2330, 2147483648
        %v2395 = vxor.u32 %v2331, 2147483648
        %v2396 = vxor.u32 %v2332, 2147483648
        %v2397 = vxor.u32 %v2333, 2147483648
        %v2398 = vxor.u32 %v2334, 2147483648
        %v2399 = vxor.u32 %v2335, 2147483648
        %v2400 = vxor.u32 %v2336, 2147483648
        %v2401 = vxor.u32 %v2337, 2147483648
        %v2402 = vxor.u32 %v2338, 2147483648
        %v2403 = vxor.u32 %v2339, 2147483648
        %v2404 = vmul.f32 %v2340, 1.442695
        %v2405 = vpow.pop %v2404
        %v2406 = vmul.f32 %v2341, 1.442695
        %v2407 = vpow.pop %v2406
        %v2408 = vmul.f32 %v2342, 1.442695
        %v2409 = vpow.pop %v2408
        %v2410 = vmul.f32 %v2343, 1.442695
        %v2411 = vpow.pop %v2410
        %v2412 = vmul.f32 %v2344, 1.442695
        %v2413 = vpow.pop %v2412
        %v2414 = vmul.f32 %v2345, 1.442695
        %v2415 = vpow.pop %v2414
        %v2416 = vmul.f32 %v2346, 1.442695
        %v2417 = vpow.pop %v2416
        %v2418 = vmul.f32 %v2347, 1.442695
        %v2419 = vpow.pop %v2418
        %v2420 = vmul.f32 %v2348, 1.442695
        %v2421 = vpow.pop %v2420
        %v2422 = vmul.f32 %v2349, 1.442695
        %v2423 = vpow.pop %v2422
        %v2424 = vmul.f32 %v2350, 1.442695
        %v2425 = vpow.pop %v2424
        %v2426 = vmul.f32 %v2351, 1.442695
        %v2427 = vpow.pop %v2426
        %v2428 = vmul.f32 %v2352, 1.442695
        %v2429 = vpow.pop %v2428
        %v2430 = vmul.f32 %v2353, 1.442695
        %v2431 = vpow.pop %v2430
        %v2432 = vmul.f32 %v2354, 1.442695
        %v2433 = vpow.pop %v2432
        %v2434 = vmul.f32 %v2355, 1.442695
        %v2435 = vpow.pop %v2434
        %v2436 = vmul.f32 %v2356, 1.442695
        %v2437 = vpow.pop %v2436
        %v2438 = vmul.f32 %v2357, 1.442695
        %v2439 = vpow.pop %v2438
        %v2440 = vmul.f32 %v2358, 1.442695
        %v2441 = vpow.pop %v2440
        %v2442 = vmul.f32 %v2359, 1.442695
        %v2443 = vpow.pop %v2442
        %v2444 = vmul.f32 %v2360, 1.442695
        %v2445 = vpow.pop %v2444
        %v2446 = vmul.f32 %v2361, 1.442695
        %v2447 = vpow.pop %v2446
        %v2448 = vmul.f32 %v2362, 1.442695
        %v2449 = vpow.pop %v2448
        %v2450 = vmul.f32 %v2363, 1.442695
        %v2451 = vpow.pop %v2450
        %v2452 = vmul.f32 %v2364, 1.442695
        %v2453 = vpow.pop %v2452
        %v2454 = vmul.f32 %v2365, 1.442695
        %v2455 = vpow.pop %v2454
        %v2456 = vmul.f32 %v2366, 1.442695
        %v2457 = vpow.pop %v2456
        %v2458 = vmul.f32 %v2367, 1.442695
        %v2459 = vpow.pop %v2458
        %v2460 = vmul.f32 %v2368, 1.442695
        %v2461 = vpow.pop %v2460
        %v2462 = vmul.f32 %v2369, 1.442695
        %v2463 = vpow.pop %v2462
        %v2464 = vmul.f32 %v2370, 1.442695
        %v2465 = vpow.pop %v2464
        %v2466 = vmul.f32 %v2371, 1.442695
        %v2467 = vpow.pop %v2466
        %v2468 = vmul.f32 %v2372, 1.442695
        %v2469 = vpow.pop %v2468
        %v2470 = vmul.f32 %v2373, 1.442695
        %v2471 = vpow.pop %v2470
        %v2472 = vmul.f32 %v2374, 1.442695
        %v2473 = vpow.pop %v2472
        %v2474 = vmul.f32 %v2375, 1.442695
        %v2475 = vpow.pop %v2474
        %v2476 = vmul.f32 %v2376, 1.442695
        %v2477 = vpow.pop %v2476
        %v2478 = vmul.f32 %v2377, 1.442695
        %v2479 = vpow.pop %v2478
        %v2480 = vmul.f32 %v2378, 1.442695
        %v2481 = vpow.pop %v2480
        %v2482 = vmul.f32 %v2379, 1.442695
        %v2483 = vpow.pop %v2482
        %v2484 = vmul.f32 %v2380, 1.442695
        %v2485 = vpow.pop %v2484
        %v2486 = vmul.f32 %v2381, 1.442695
        %v2487 = vpow.pop %v2486
        %v2488 = vmul.f32 %v2382, 1.442695
        %v2489 = vpow.pop %v2488
        %v2490 = vmul.f32 %v2383, 1.442695
        %v2491 = vpow.pop %v2490
        %v2492 = vmul.f32 %v2384, 1.442695
        %v2493 = vpow.pop %v2492
        %v2494 = vmul.f32 %v2385, 1.442695
        %v2495 = vpow.pop %v2494
        %v2496 = vmul.f32 %v2386, 1.442695
        %v2497 = vpow.pop %v2496
        %v2498 = vmul.f32 %v2387, 1.442695
        %v2499 = vpow.pop %v2498
        %v2500 = vmul.f32 %v2388, 1.442695
        %v2501 = vpow.pop %v2500
        %v2502 = vmul.f32 %v2389, 1.442695
        %v2503 = vpow.pop %v2502
        %v2504 = vmul.f32 %v2390, 1.442695
        %v2505 = vpow.pop %v2504
        %v2506 = vmul.f32 %v2391, 1.442695
        %v2507 = vpow.pop %v2506
        %v2508 = vmul.f32 %v2392, 1.442695
        %v2509 = vpow.pop %v2508
        %v2510 = vmul.f32 %v2393, 1.442695
        %v2511 = vpow.pop %v2510
        %v2512 = vmul.f32 %v2394, 1.442695
        %v2513 = vpow.pop %v2512
        %v2514 = vmul.f32 %v2395, 1.442695
        %v2515 = vpow.pop %v2514
        %v2516 = vmul.f32 %v2396, 1.442695
        %v2517 = vpow.pop %v2516
        %v2518 = vmul.f32 %v2397, 1.442695
        %v2519 = vpow.pop %v2518
        %v2520 = vmul.f32 %v2398, 1.442695
        %v2521 = vpow.pop %v2520
        %v2522 = vmul.f32 %v2399, 1.442695
        %v2523 = vpow.pop %v2522
        %v2524 = vmul.f32 %v2400, 1.442695
        %v2525 = vpow.pop %v2524
        %v2526 = vmul.f32 %v2401, 1.442695
        %v2527 = vpow.pop %v2526
        %v2528 = vmul.f32 %v2402, 1.442695
        %v2529 = vpow.pop %v2528
        %v2530 = vmul.f32 %v2403, 1.442695
        %v2531 = vpow.pop %v2530
        %v2532 = vadd.f32 %v2405, 1.0
        %v2533 = vadd.f32 %v2407, 1.0
        %v2534 = vadd.f32 %v2409, 1.0
        %v2535 = vadd.f32 %v2411, 1.0
        %v2536 = vadd.f32 %v2413, 1.0
        %v2537 = vadd.f32 %v2415, 1.0
        %v2538 = vadd.f32 %v2417, 1.0
        %v2539 = vadd.f32 %v2419, 1.0
        %v2540 = vadd.f32 %v2421, 1.0
        %v2541 = vadd.f32 %v2423, 1.0
        %v2542 = vadd.f32 %v2425, 1.0
        %v2543 = vadd.f32 %v2427, 1.0
        %v2544 = vadd.f32 %v2429, 1.0
        %v2545 = vadd.f32 %v2431, 1.0
        %v2546 = vadd.f32 %v2433, 1.0
        %v2547 = vadd.f32 %v2435, 1.0
        %v2548 = vadd.f32 %v2437, 1.0
        %v2549 = vadd.f32 %v2439, 1.0
        %v2550 = vadd.f32 %v2441, 1.0
        %v2551 = vadd.f32 %v2443, 1.0
        %v2552 = vadd.f32 %v2445, 1.0
        %v2553 = vadd.f32 %v2447, 1.0
        %v2554 = vadd.f32 %v2449, 1.0
        %v2555 = vadd.f32 %v2451, 1.0
        %v2556 = vadd.f32 %v2453, 1.0
        %v2557 = vadd.f32 %v2455, 1.0
        %v2558 = vadd.f32 %v2457, 1.0
        %v2559 = vadd.f32 %v2459, 1.0
        %v2560 = vadd.f32 %v2461, 1.0
        %v2561 = vadd.f32 %v2463, 1.0
        %v2562 = vadd.f32 %v2465, 1.0
        %v2563 = vadd.f32 %v2467, 1.0
        %v2564 = vadd.f32 %v2469, 1.0
        %v2565 = vadd.f32 %v2471, 1.0
        %v2566 = vadd.f32 %v2473, 1.0
        %v2567 = vadd.f32 %v2475, 1.0
        %v2568 = vadd.f32 %v2477, 1.0
        %v2569 = vadd.f32 %v2479, 1.0
        %v2570 = vadd.f32 %v2481, 1.0
        %v2571 = vadd.f32 %v2483, 1.0
        %v2572 = vadd.f32 %v2485, 1.0
        %v2573 = vadd.f32 %v2487, 1.0
        %v2574 = vadd.f32 %v2489, 1.0
        %v2575 = vadd.f32 %v2491, 1.0
        %v2576 = vadd.f32 %v2493, 1.0
        %v2577 = vadd.f32 %v2495, 1.0
        %v2578 = vadd.f32 %v2497, 1.0
        %v2579 = vadd.f32 %v2499, 1.0
        %v2580 = vadd.f32 %v2501, 1.0
        %v2581 = vadd.f32 %v2503, 1.0
        %v2582 = vadd.f32 %v2505, 1.0
        %v2583 = vadd.f32 %v2507, 1.0
        %v2584 = vadd.f32 %v2509, 1.0
        %v2585 = vadd.f32 %v2511, 1.0
        %v2586 = vadd.f32 %v2513, 1.0
        %v2587 = vadd.f32 %v2515, 1.0
        %v2588 = vadd.f32 %v2517, 1.0
        %v2589 = vadd.f32 %v2519, 1.0
        %v2590 = vadd.f32 %v2521, 1.0
        %v2591 = vadd.f32 %v2523, 1.0
        %v2592 = vadd.f32 %v2525, 1.0
        %v2593 = vadd.f32 %v2527, 1.0
        %v2594 = vadd.f32 %v2529, 1.0
        %v2595 = vadd.f32 %v2531, 1.0
        %v2596 = vrcp.pop %v2532
        %v2597 = vmul.f32 1.0, %v2596
        %v2598 = vrcp.pop %v2533
        %v2599 = vmul.f32 1.0, %v2598
        %v2600 = vrcp.pop %v2534
        %v2601 = vmul.f32 1.0, %v2600
        %v2602 = vrcp.pop %v2535
        %v2603 = vmul.f32 1.0, %v2602
        %v2604 = vrcp.pop %v2536
        %v2605 = vmul.f32 1.0, %v2604
        %v2606 = vrcp.pop %v2537
        %v2607 = vmul.f32 1.0, %v2606
        %v2608 = vrcp.pop %v2538
        %v2609 = vmul.f32 1.0, %v2608
        %v2610 = vrcp.pop %v2539
        %v2611 = vmul.f32 1.0, %v2610
        %v2612 = vrcp.pop %v2540
        %v2613 = vmul.f32 1.0, %v2612
        %v2614 = vrcp.pop %v2541
        %v2615 = vmul.f32 1.0, %v2614
        %v2616 = vrcp.pop %v2542
        %v2617 = vmul.f32 1.0, %v2616
        %v2618 = vrcp.pop %v2543
        %v2619 = vmul.f32 1.0, %v2618
        %v2620 = vrcp.pop %v2544
        %v2621 = vmul.f32 1.0, %v2620
        %v2622 = vrcp.pop %v2545
        %v2623 = vmul.f32 1.0, %v2622
        %v2624 = vrcp.pop %v2546
        %v2625 = vmul.f32 1.0, %v2624
        %v2626 = vrcp.pop %v2547
        %v2627 = vmul.f32 1.0, %v2626
        %v2628 = vrcp.pop %v2548
        %v2629 = vmul.f32 1.0, %v2628
        %v2630 = vrcp.pop %v2549
        %v2631 = vmul.f32 1.0, %v2630
        %v2632 = vrcp.pop %v2550
        %v2633 = vmul.f32 1.0, %v2632
        %v2634 = vrcp.pop %v2551
        %v2635 = vmul.f32 1.0, %v2634
        %v2636 = vrcp.pop %v2552
        %v2637 = vmul.f32 1.0, %v2636
        %v2638 = vrcp.pop %v2553
        %v2639 = vmul.f32 1.0, %v2638
        %v2640 = vrcp.pop %v2554
        %v2641 = vmul.f32 1.0, %v2640
        %v2642 = vrcp.pop %v2555
        %v2643 = vmul.f32 1.0, %v2642
        %v2644 = vrcp.pop %v2556
        %v2645 = vmul.f32 1.0, %v2644
        %v2646 = vrcp.pop %v2557
        %v2647 = vmul.f32 1.0, %v2646
        %v2648 = vrcp.pop %v2558
        %v2649 = vmul.f32 1.0, %v2648
        %v2650 = vrcp.pop %v2559
        %v2651 = vmul.f32 1.0, %v2650
        %v2652 = vrcp.pop %v2560
        %v2653 = vmul.f32 1.0, %v2652
        %v2654 = vrcp.pop %v2561
        %v2655 = vmul.f32 1.0, %v2654
        %v2656 = vrcp.pop %v2562
        %v2657 = vmul.f32 1.0, %v2656
        %v2658 = vrcp.pop %v2563
        %v2659 = vmul.f32 1.0, %v2658
        %v2660 = vrcp.pop %v2564
        %v2661 = vmul.f32 1.0, %v2660
        %v2662 = vrcp.pop %v2565
        %v2663 = vmul.f32 1.0, %v2662
        %v2664 = vrcp.pop %v2566
        %v2665 = vmul.f32 1.0, %v2664
        %v2666 = vrcp.pop %v2567
        %v2667 = vmul.f32 1.0, %v2666
        %v2668 = vrcp.pop %v2568
        %v2669 = vmul.f32 1.0, %v2668
        %v2670 = vrcp.pop %v2569
        %v2671 = vmul.f32 1.0, %v2670
        %v2672 = vrcp.pop %v2570
        %v2673 = vmul.f32 1.0, %v2672
        %v2674 = vrcp.pop %v2571
        %v2675 = vmul.f32 1.0, %v2674
        %v2676 = vrcp.pop %v2572
        %v2677 = vmul.f32 1.0, %v2676
        %v2678 = vrcp.pop %v2573
        %v2679 = vmul.f32 1.0, %v2678
        %v2680 = vrcp.pop %v2574
        %v2681 = vmul.f32 1.0, %v2680
        %v2682 = vrcp.pop %v2575
        %v2683 = vmul.f32 1.0, %v2682
        %v2684 = vrcp.pop %v2576
        %v2685 = vmul.f32 1.0, %v2684
        %v2686 = vrcp.pop %v2577
        %v2687 = vmul.f32 1.0, %v2686
        %v2688 = vrcp.pop %v2578
        %v2689 = vmul.f32 1.0, %v2688
        %v2690 = vrcp.pop %v2579
        %v2691 = vmul.f32 1.0, %v2690
        %v2692 = vrcp.pop %v2580
        %v2693 = vmul.f32 1.0, %v2692
        %v2694 = vrcp.pop %v2581
        %v2695 = vmul.f32 1.0, %v2694
        %v2696 = vrcp.pop %v2582
        %v2697 = vmul.f32 1.0, %v2696
        %v2698 = vrcp.pop %v2583
        %v2699 = vmul.f32 1.0, %v2698
        %v2700 = vrcp.pop %v2584
        %v2701 = vmul.f32 1.0, %v2700
        %v2702 = vrcp.pop %v2585
        %v2703 = vmul.f32 1.0, %v2702
        %v2704 = vrcp.pop %v2586
        %v2705 = vmul.f32 1.0, %v2704
        %v2706 = vrcp.pop %v2587
        %v2707 = vmul.f32 1.0, %v2706
        %v2708 = vrcp.pop %v2588
        %v2709 = vmul.f32 1.0, %v2708
        %v2710 = vrcp.pop %v2589
        %v2711 = vmul.f32 1.0, %v2710
        %v2712 = vrcp.pop %v2590
        %v2713 = vmul.f32 1.0, %v2712
        %v2714 = vrcp.pop %v2591
        %v2715 = vmul.f32 1.0, %v2714
        %v2716 = vrcp.pop %v2592
        %v2717 = vmul.f32 1.0, %v2716
        %v2718 = vrcp.pop %v2593
        %v2719 = vmul.f32 1.0, %v2718
        %v2720 = vrcp.pop %v2594
        %v2721 = vmul.f32 1.0, %v2720
        %v2722 = vrcp.pop %v2595
        %v2723 = vmul.f32 1.0, %v2722
        %2724 = vst [vmem:[%s272] sm:$0xff] %v2597
        %2725 = vst [vmem:[%s272 + $0x8] sm:$0xff] %v2599
        %2726 = vst [vmem:[%s272 + $0x10] sm:$0xff] %v2601
        %2727 = vst [vmem:[%s272 + $0x18] sm:$0xff] %v2603
        %2728 = vst [vmem:[%s272 + $0x20] sm:$0xff] %v2605
        %2729 = vst [vmem:[%s272 + $0x28] sm:$0xff] %v2607
        %2730 = vst [vmem:[%s272 + $0x30] sm:$0xff] %v2609
        %2731 = vst [vmem:[%s272 + $0x38] sm:$0xff] %v2611
        %2732 = vst [vmem:[%s272 + $0x40] sm:$0xff] %v2613
        %2733 = vst [vmem:[%s272 + $0x48] sm:$0xff] %v2615
        %2734 = vst [vmem:[%s272 + $0x50] sm:$0xff] %v2617
        %2735 = vst [vmem:[%s272 + $0x58] sm:$0xff] %v2619
        %2736 = vst [vmem:[%s272 + $0x60] sm:$0xff] %v2621
        %2737 = vst [vmem:[%s272 + $0x68] sm:$0xff] %v2623
        %2738 = vst [vmem:[%s272 + $0x70] sm:$0xff] %v2625
        %2739 = vst [vmem:[%s272 + $0x78] sm:$0xff] %v2627
        %2740 = vst [vmem:[%s272 + $0x80] sm:$0xff] %v2629
        %2741 = vst [vmem:[%s272 + $0x88] sm:$0xff] %v2631
        %2742 = vst [vmem:[%s272 + $0x90] sm:$0xff] %v2633
        %2743 = vst [vmem:[%s272 + $0x98] sm:$0xff] %v2635
        %2744 = vst [vmem:[%s272 + $0xa0] sm:$0xff] %v2637
        %2745 = vst [vmem:[%s272 + $0xa8] sm:$0xff] %v2639
        %2746 = vst [vmem:[%s272 + $0xb0] sm:$0xff] %v2641
        %2747 = vst [vmem:[%s272 + $0xb8] sm:$0xff] %v2643
        %2748 = vst [vmem:[%s272 + $0xc0] sm:$0xff] %v2645
        %2749 = vst [vmem:[%s272 + $0xc8] sm:$0xff] %v2647
        %2750 = vst [vmem:[%s272 + $0xd0] sm:$0xff] %v2649
        %2751 = vst [vmem:[%s272 + $0xd8] sm:$0xff] %v2651
        %2752 = vst [vmem:[%s272 + $0xe0] sm:$0xff] %v2653
        %2753 = vst [vmem:[%s272 + $0xe8] sm:$0xff] %v2655
        %2754 = vst [vmem:[%s272 + $0xf0] sm:$0xff] %v2657
        %2755 = vst [vmem:[%s272 + $0xf8] sm:$0xff] %v2659
        %2756 = vst [vmem:[%s272 + $0x100] sm:$0xff] %v2661
        %2757 = vst [vmem:[%s272 + $0x108] sm:$0xff] %v2663
        %2758 = vst [vmem:[%s272 + $0x110] sm:$0xff] %v2665
        %2759 = vst [vmem:[%s272 + $0x118] sm:$0xff] %v2667
        %2760 = vst [vmem:[%s272 + $0x120] sm:$0xff] %v2669
        %2761 = vst [vmem:[%s272 + $0x128] sm:$0xff] %v2671
        %2762 = vst [vmem:[%s272 + $0x130] sm:$0xff] %v2673
        %2763 = vst [vmem:[%s272 + $0x138] sm:$0xff] %v2675
        %2764 = vst [vmem:[%s272 + $0x140] sm:$0xff] %v2677
        %2765 = vst [vmem:[%s272 + $0x148] sm:$0xff] %v2679
        %2766 = vst [vmem:[%s272 + $0x150] sm:$0xff] %v2681
        %2767 = vst [vmem:[%s272 + $0x158] sm:$0xff] %v2683
        %2768 = vst [vmem:[%s272 + $0x160] sm:$0xff] %v2685
        %2769 = vst [vmem:[%s272 + $0x168] sm:$0xff] %v2687
        %2770 = vst [vmem:[%s272 + $0x170] sm:$0xff] %v2689
        %2771 = vst [vmem:[%s272 + $0x178] sm:$0xff] %v2691
        %2772 = vst [vmem:[%s272 + $0x180] sm:$0xff] %v2693
        %2773 = vst [vmem:[%s272 + $0x188] sm:$0xff] %v2695
        %2774 = vst [vmem:[%s272 + $0x190] sm:$0xff] %v2697
        %2775 = vst [vmem:[%s272 + $0x198] sm:$0xff] %v2699
        %2776 = vst [vmem:[%s272 + $0x1a0] sm:$0xff] %v2701
        %2777 = vst [vmem:[%s272 + $0x1a8] sm:$0xff] %v2703
        %2778 = vst [vmem:[%s272 + $0x1b0] sm:$0xff] %v2705
        %2779 = vst [vmem:[%s272 + $0x1b8] sm:$0xff] %v2707
        %2780 = vst [vmem:[%s272 + $0x1c0] sm:$0xff] %v2709
        %2781 = vst [vmem:[%s272 + $0x1c8] sm:$0xff] %v2711
        %2782 = vst [vmem:[%s272 + $0x1d0] sm:$0xff] %v2713
        %2783 = vst [vmem:[%s272 + $0x1d8] sm:$0xff] %v2715
        %2784 = vst [vmem:[%s272 + $0x1e0] sm:$0xff] %v2717
        %2785 = vst [vmem:[%s272 + $0x1e8] sm:$0xff] %v2719
        %2786 = vst [vmem:[%s272 + $0x1f0] sm:$0xff] %v2721
        %2787 = vst [vmem:[%s272 + $0x1f8] sm:$0xff] %v2723
        %s2788 = sand.u32 %s181, 1
        %s2789 = scalar_lea.sflag [#allocation3], %s2788
        %s2790 = sand.u32 %s181, 1
        %s2791 = smul.addr %s2790, 512
        %s2792 = scalar_lea.vmem [#allocation2], %s2791
        // Predicated region
        $region49: #{tpu_custom_call.1} parent=47 // pred_check
          %p2793 = pneg %p191
        $region50: #{tpu_custom_call.1} parent=47 // pred_check_branch
          %2795 = sbr.rel (%p2793) target = $region52
        $region51: #{tpu_custom_call.1} parent=47 // pred_region
          %s2796 = smul.u32 64, %s21
          %s2798 = ssub.s32 8192, 8192
          %2799 = vsyncadd %s2789, %s2798
          %s2800 = smul.addr %s2796, 128
          %s2801 = scalar_lea.hbm %s7, %s2800
          %s2802 = sshll.u32 %s2792, 4
          %s2803 = int_to_ptr.vmem [resolvable:$true] %s2802
          %2808 = dma.vmem_to_hbm [thread:$0]  %s2803, 8192, %s2801, %s2789, 128, 128, 8
        $region52: #{tpu_custom_call.1} parent=47 // pred_fallthru
          _
      $region48: #{tpu_custom_call.1} parent=5 // pred_fallthru
        _
      %p2809 = scmp.le.s32.totalorder 2, %s16
      // Predicated region
      $region53: #{tpu_custom_call.1} parent=5 // pred_check
        %p2810 = pneg %p2809
      $region54: #{tpu_custom_call.1} parent=5 // pred_check_branch
        %2812 = sbr.rel (%p2810) target = $region56
      $region55: #{tpu_custom_call.1} parent=5 // pred_region
        %s2813 = ssub.s32 %s16, 2
        // Predicated region
        $region57: #{tpu_custom_call.1} parent=55 // pred_check
          %p2814 = pneg %p197
        $region58: #{tpu_custom_call.1} parent=55 // pred_check_branch
          %2816 = sbr.rel (%p2814) target = $region60
        $region59: #{tpu_custom_call.1} parent=55 // pred_region
          %s2817 = sand.u32 %s182, 1
          %s2818 = scalar_lea.sflag [#allocation3], %s2817
          %s2819 = sand.u32 %s182, 1
          %s2820 = smul.addr %s2819, 512
          %s2821 = scalar_lea.vmem [#allocation2], %s2820
          %2822 = dma.done %s2818, 8192
        $region60: #{tpu_custom_call.1} parent=55 // pred_fallthru
          _
      $region56: #{tpu_custom_call.1} parent=5 // pred_fallthru
        _
    $region6: #{tpu_custom_call.1} parent=1 // loop_footer
      %s20 = sadd.s32 1, %s16
    $region7: #{tpu_custom_call.1} parent=1 // loop_footer_branch
      %15 = sbr.rel target = $region3
    $region8: #{tpu_custom_call.1} parent=1 // loop_exit
      _
    %2823 = vsyncpa [#allocation3], 1
    %s2824 = scalar_lea.sflag [#allocation3], 1
    %2825 = vsyncpa %s2824, 1

</llo_original>
